<compile_context>
chip_gen: v7x
topology: tpu7x:2x2x1
jax: 0.10.0
libtpu: 0.0.40
codegen_flags: <defaults>
</compile_context>

<pallas_src>
import functools
import math

import jax
import jax.numpy as jnp
from jax.experimental import pallas as pl
from jax.experimental.pallas import tpu as pltpu


def _round_up(x, m):
    return (x + m - 1) // m * m


# ----------------------------------------------------------------------------
# Pallas kernel: K-packed 3x3/s2 conv GEMM + bias + SiLU + fused 1x1 head conv
# ----------------------------------------------------------------------------
def _stage_kernel(patch_ref, wc_ref, bc_ref, wh_ref, bh_ref, fpn_ref, head_ref):
    """One (batch, row-tile) grid step.

    patch_ref: (1, tm, K9p)  bf16  im2col'd input rows (K9p = 9*Cin, 16-padded)
    wc_ref   : (K9p, Cout)   bf16  packed conv weight
    bc_ref   : (1, Cout)     f32   conv bias
    wh_ref   : (Cout, Nout)  bf16  1x1 head weight
    bh_ref   : (1, Nout)     f32   head bias
    fpn_ref  : (1, tm, Cout) bf16  SiLU feature output (next stage's input)
    head_ref : (1, tm, Nout) f32   head output
    """
    a = patch_ref[0]                                           # (tm, K9p) bf16
    acc = jnp.dot(a, wc_ref[...], preferred_element_type=jnp.float32)
    acc = acc + bc_ref[...]                                    # bias, f32
    fpn = acc * jax.nn.sigmoid(acc)                            # SiLU, f32
    fpn_bf = fpn.astype(jnp.bfloat16)
    fpn_ref[0] = fpn_bf

    # fused per-level 1x1 head conv on the VMEM-resident SiLU result (K = Cout)
    head = jnp.dot(fpn_bf, wh_ref[...], preferred_element_type=jnp.float32)
    head_ref[0] = head + bh_ref[...]


# ----------------------------------------------------------------------------
# Wrapper glue: bf16 im2col, tiling, weight packing
# ----------------------------------------------------------------------------
def _im2col_s2(x_nhwc):
    """3x3 / stride-2 / pad-1 patches: ([B, Ho*Wo, 9*Cin], Ho, Wo).

    Tap-major, input-channel-fastest row layout (matches the weight packing).
    """
    b, h, w, c = x_nhwc.shape
    ho, wo = (h - 1) // 2 + 1, (w - 1) // 2 + 1
    xp = jnp.pad(x_nhwc, ((0, 0), (1, 1), (1, 1), (0, 0)))
    taps = [xp[:, ki:ki + 2 * ho:2, kj:kj + 2 * wo:2, :]
            for ki in range(3) for kj in range(3)]
    patches = jnp.concatenate(taps, axis=-1)                   # [B,Ho,Wo,9*Cin]
    return patches.reshape(b, ho * wo, 9 * c), ho, wo


def fused_stage(x_nhwc, w_conv, b_conv, w_head, b_head, *, tm_target=1024):
    """Backbone stage (3x3 s2 conv + bias + SiLU) with its 1x1 head level fused.

    x_nhwc: [B,H,W,Cin]; w_conv: torch [Cout,Cin,3,3]; w_head: [Nout,Cout,1,1].
    Returns (fpn [B,Ho,Wo,Cout] bf16, head [B,Ho*Wo,Nout] f32).
    """
    bsz = x_nhwc.shape[0]
    cout, cin, kh, kw = w_conv.shape
    nout = w_head.shape[0]
    assert (kh, kw) == (3, 3)

    patches, ho, wo = _im2col_s2(x_nhwc)
    n_pix = ho * wo
    k9 = 9 * cin
    k9p = _round_up(k9, 16)            # bf16 sublane quantum for the GEMM RHS

    # Row tile: multiple of 16 (bf16 sublane), capped so per-step VMEM stays
    # small even on v7x (64 MiB).  A valid tile always exists by construction.
    tm = min(tm_target, _round_up(n_pix, 16))
    n_pix_pad = _round_up(n_pix, tm)
    n_r = n_pix_pad // tm

    patches = jnp.pad(
        patches, ((0, 0), (0, n_pix_pad - n_pix), (0, k9p - k9))
    ).astype(jnp.bfloat16)

    # Weight packing: (kh, kw, cin, cout) row order matches the tap concat order.
    wc = jnp.transpose(w_conv, (2, 3, 1, 0)).reshape(k9, cout)
    wc = jnp.pad(wc, ((0, k9p - k9), (0, 0))).astype(jnp.bfloat16)
    bc = b_conv.reshape(1, cout).astype(jnp.float32)
    wh = jnp.transpose(w_head[:, :, 0, 0], (1, 0)).astype(jnp.bfloat16)  # (cout, nout)
    bh = b_head.reshape(1, nout).astype(jnp.float32)

    fpn, head = pl.pallas_call(
        _stage_kernel,
        out_shape=(
            jax.ShapeDtypeStruct((bsz, n_pix_pad, cout), jnp.bfloat16),
            jax.ShapeDtypeStruct((bsz, n_pix_pad, nout), jnp.float32),
        ),
        grid=(bsz, n_r),
        in_specs=[
            pl.BlockSpec((1, tm, k9p), lambda b, r: (b, r, 0)),
            pl.BlockSpec((k9p, cout), lambda b, r: (0, 0)),
            pl.BlockSpec((1, cout), lambda b, r: (0, 0)),
            pl.BlockSpec((cout, nout), lambda b, r: (0, 0)),
            pl.BlockSpec((1, nout), lambda b, r: (0, 0)),
        ],
        out_specs=(
            pl.BlockSpec((1, tm, cout), lambda b, r: (b, r, 0)),
            pl.BlockSpec((1, tm, nout), lambda b, r: (b, r, 0)),
        ),
        compiler_params=pltpu.CompilerParams(
            dimension_semantics=("parallel", "parallel")),
    )(patches, wc, bc, wh, bh)

    # drop the row padding; fpn back to NHWC for the next stage's im2col
    fpn = fpn[:, :n_pix, :].reshape(bsz, ho, wo, cout)
    head = head[:, :n_pix, :]
    return fpn, head


# ----------------------------------------------------------------------------
# Deterministic synthetic parameters (no checkpoint loading)
# ----------------------------------------------------------------------------
def init_params(key, in_ch, widths, num_outputs):
    params = {}
    ch = in_ch
    for idx, w in enumerate(widths):
        key, k1, k2 = jax.random.split(key, 3)
        params[f"bb{idx}_w"] = (
            jax.random.normal(k1, (w, ch, 3, 3), jnp.float32) / math.sqrt(ch * 9))
        params[f"bb{idx}_b"] = 0.01 * jax.random.normal(k2, (w,), jnp.float32)
        ch = w
    for idx, w in enumerate(widths):
        key, k1, k2 = jax.random.split(key, 3)
        params[f"head{idx}_w"] = (
            jax.random.normal(k1, (num_outputs, w, 1, 1), jnp.float32) / math.sqrt(w))
        params[f"head{idx}_b"] = 0.01 * jax.random.normal(
            k2, (num_outputs,), jnp.float32)
    return params


# ----------------------------------------------------------------------------
# YOLOX.forward: fpn_outs = backbone(x); outputs = head(fpn_outs)
# ----------------------------------------------------------------------------
def yolox_forward(params, x_nchw, widths=(8, 16, 32), num_outputs=8):
    assert params["head0_w"].shape[0] == num_outputs
    x = jnp.transpose(x_nchw, (0, 2, 3, 1)).astype(jnp.float32)  # NCHW -> NHWC
    head_outs = []
    for idx in range(len(widths)):
        # each backbone stage output is an FPN level; its head conv is fused
        x, h = fused_stage(x, params[f"bb{idx}_w"], params[f"bb{idx}_b"],
                           params[f"head{idx}_w"], params[f"head{idx}_b"])
        head_outs.append(h)
    return jnp.concatenate(head_outs, axis=1)   # [B, sum(H*W), 5 + num_classes]


if __name__ == "__main__":
    key = jax.random.PRNGKey(0)
    k_x, k_p = jax.random.split(key)

    B, C, H, W = 2, 4, 16, 16               # small NCHW input, PyTorch convention
    widths = (8, 16, 32)                     # backbone stage widths (FPN channels)
    num_classes = 3
    num_outputs = num_classes + 5            # cls + box(4) + obj

    x = jax.random.normal(k_x, (B, C, H, W), jnp.float32)
    params = init_params(k_p, C, widths, num_outputs)

    fwd = jax.jit(functools.partial(yolox_forward, widths=widths,
                                    num_outputs=num_outputs))
    out = jax.block_until_ready(fwd(params, x))

    expected_anchors = (H // 2) * (W // 2) + (H // 4) * (W // 4) + (H // 8) * (W // 8)
    assert out.shape == (B, expected_anchors, num_outputs), out.shape
    assert bool(jnp.all(jnp.isfinite(out)))
    print("KERNEL_OK")
</pallas_src>

<mosaic_0001>
module attributes {stable_mosaic.version = 11 : i64} {
  func.func @_stage_kernel(%arg0: i32, %arg1: i32, %arg2: memref<1x64x48xbf16, #tpu.memory_space<vmem>>, %arg3: memref<48x8xbf16, #tpu.memory_space<vmem>>, %arg4: memref<1x8xf32, #tpu.memory_space<vmem>>, %arg5: memref<8x8xbf16, #tpu.memory_space<vmem>>, %arg6: memref<1x8xf32, #tpu.memory_space<vmem>>, %arg7: memref<1x64x8xbf16, #tpu.memory_space<vmem>>, %arg8: memref<1x64x8xf32, #tpu.memory_space<vmem>>) attributes {dimension_semantics = [#tpu.dimension_semantics<parallel>, #tpu.dimension_semantics<parallel>], iteration_bounds = array<i64: 2, 1>, scalar_prefetch = 0 : i64, scratch_operands = 0 : i64, tpu.core_type = #tpu.core_type<tc>, window_params = [{transform_indices = @transform_0, window_bounds = array<i64: 1, 64, 48>}, {pipeline_mode = #tpu.pipeline_mode<synchronous>, transform_indices = @transform_1, window_bounds = array<i64: 48, 8>}, {pipeline_mode = #tpu.pipeline_mode<synchronous>, transform_indices = @transform_2, window_bounds = array<i64: 1, 8>}, {pipeline_mode = #tpu.pipeline_mode<synchronous>, transform_indices = @transform_3, window_bounds = array<i64: 8, 8>}, {pipeline_mode = #tpu.pipeline_mode<synchronous>, transform_indices = @transform_4, window_bounds = array<i64: 1, 8>}, {transform_indices = @transform_5, window_bounds = array<i64: 1, 64, 8>}, {transform_indices = @transform_6, window_bounds = array<i64: 1, 64, 8>}]} {
    %c0 = arith.constant 0 : index
    %c0_0 = arith.constant 0 : index
    %c0_1 = arith.constant 0 : index
    %0 = vector.load %arg2[%c0, %c0_0, %c0_1] : memref<1x64x48xbf16, #tpu.memory_space<vmem>>, vector<1x64x48xbf16>
    %1 = vector.shape_cast %0 : vector<1x64x48xbf16> to vector<64x48xbf16>
    %c0_2 = arith.constant 0 : index
    %c0_3 = arith.constant 0 : index
    %2 = vector.load %arg3[%c0_2, %c0_3] : memref<48x8xbf16, #tpu.memory_space<vmem>>, vector<48x8xbf16>
    %cst = arith.constant dense<0.000000e+00> : vector<64x8xf32>
    %3 = tpu.matmul %1, %2, %cst {dimension_numbers = #tpu.dot_dimension_numbers<[1], [0], [0], [1], [0, 0, 1, 1], [], []>} : vector<64x48xbf16>, vector<48x8xbf16>, vector<64x8xf32> -> vector<64x8xf32>
    %c0_4 = arith.constant 0 : index
    %c0_5 = arith.constant 0 : index
    %4 = vector.load %arg4[%c0_4, %c0_5] : memref<1x8xf32, #tpu.memory_space<vmem>>, vector<1x8xf32>
    %5 = vector.broadcast %4 : vector<1x8xf32> to vector<64x8xf32>
    %6 = arith.addf %3, %5 : vector<64x8xf32>
    %7 = arith.negf %6 : vector<64x8xf32>
    %8 = math.exp %7 : vector<64x8xf32>
    %cst_6 = arith.constant 1.000000e+00 : f32
    %9 = vector.broadcast %cst_6 : f32 to vector<64x8xf32>
    %10 = arith.addf %9, %8 : vector<64x8xf32>
    %11 = arith.divf %9, %10 : vector<64x8xf32>
    %12 = arith.mulf %6, %11 : vector<64x8xf32>
    %13 = arith.truncf %12 : vector<64x8xf32> to vector<64x8xbf16>
    %c0_7 = arith.constant 0 : index
    %c0_8 = arith.constant 0 : index
    %c0_9 = arith.constant 0 : index
    %14 = vector.load %arg7[%c0_7, %c0_8, %c0_9] : memref<1x64x8xbf16, #tpu.memory_space<vmem>>, vector<1x64x8xbf16>
    %15 = vector.shape_cast %14 : vector<1x64x8xbf16> to vector<64x8xbf16>
    %16 = vector.shape_cast %13 : vector<64x8xbf16> to vector<1x64x8xbf16>
    tpu.vector_store %arg7[%c0_7, %c0_8, %c0_9], %16 {strides = array<i32>} : memref<1x64x8xbf16, #tpu.memory_space<vmem>>, vector<1x64x8xbf16>,
    %c0_10 = arith.constant 0 : index
    %c0_11 = arith.constant 0 : index
    %17 = vector.load %arg5[%c0_10, %c0_11] : memref<8x8xbf16, #tpu.memory_space<vmem>>, vector<8x8xbf16>
    %cst_12 = arith.constant dense<0.000000e+00> : vector<64x8xf32>
    %18 = tpu.matmul %13, %17, %cst_12 {dimension_numbers = #tpu.dot_dimension_numbers<[1], [0], [0], [1], [0, 0, 1, 1], [], []>} : vector<64x8xbf16>, vector<8x8xbf16>, vector<64x8xf32> -> vector<64x8xf32>
    %c0_13 = arith.constant 0 : index
    %c0_14 = arith.constant 0 : index
    %19 = vector.load %arg6[%c0_13, %c0_14] : memref<1x8xf32, #tpu.memory_space<vmem>>, vector<1x8xf32>
    %20 = vector.broadcast %19 : vector<1x8xf32> to vector<64x8xf32>
    %21 = arith.addf %18, %20 : vector<64x8xf32>
    %c0_15 = arith.constant 0 : index
    %c0_16 = arith.constant 0 : index
    %c0_17 = arith.constant 0 : index
    %22 = vector.load %arg8[%c0_15, %c0_16, %c0_17] : memref<1x64x8xf32, #tpu.memory_space<vmem>>, vector<1x64x8xf32>
    %23 = vector.shape_cast %22 : vector<1x64x8xf32> to vector<64x8xf32>
    %24 = vector.shape_cast %21 : vector<64x8xf32> to vector<1x64x8xf32>
    tpu.vector_store %arg8[%c0_15, %c0_16, %c0_17], %24 {strides = array<i32>} : memref<1x64x8xf32, #tpu.memory_space<vmem>>, vector<1x64x8xf32>,
    return
  }
  func.func @transform_0(%arg0: i32, %arg1: i32) -> (i32, i32, i32) {
    %c0_i32 = arith.constant 0 : i32
    %c0_i32_0 = arith.constant 0 : i32
    return %arg0, %arg1, %c0_i32 : i32, i32, i32
  }
  func.func @transform_1(%arg0: i32, %arg1: i32) -> (i32, i32) {
    %c0_i32 = arith.constant 0 : i32
    %c0_i32_0 = arith.constant 0 : i32
    %c0_i32_1 = arith.constant 0 : i32
    return %c0_i32, %c0_i32_0 : i32, i32
  }
  func.func @transform_2(%arg0: i32, %arg1: i32) -> (i32, i32) {
    %c0_i32 = arith.constant 0 : i32
    %c0_i32_0 = arith.constant 0 : i32
    %c0_i32_1 = arith.constant 0 : i32
    return %c0_i32, %c0_i32_0 : i32, i32
  }
  func.func @transform_3(%arg0: i32, %arg1: i32) -> (i32, i32) {
    %c0_i32 = arith.constant 0 : i32
    %c0_i32_0 = arith.constant 0 : i32
    %c0_i32_1 = arith.constant 0 : i32
    return %c0_i32, %c0_i32_0 : i32, i32
  }
  func.func @transform_4(%arg0: i32, %arg1: i32) -> (i32, i32) {
    %c0_i32 = arith.constant 0 : i32
    %c0_i32_0 = arith.constant 0 : i32
    %c0_i32_1 = arith.constant 0 : i32
    return %c0_i32, %c0_i32_0 : i32, i32
  }
  func.func @transform_5(%arg0: i32, %arg1: i32) -> (i32, i32, i32) {
    %c0_i32 = arith.constant 0 : i32
    %c0_i32_0 = arith.constant 0 : i32
    return %arg0, %arg1, %c0_i32 : i32, i32, i32
  }
  func.func @transform_6(%arg0: i32, %arg1: i32) -> (i32, i32, i32) {
    %c0_i32 = arith.constant 0 : i32
    %c0_i32_0 = arith.constant 0 : i32
    return %arg0, %arg1, %c0_i32 : i32, i32, i32
  }
}

module attributes {stable_mosaic.version = 11 : i64} {
  func.func @_stage_kernel(%arg0: i32, %arg1: i32, %arg2: memref<1x16x80xbf16, #tpu.memory_space<vmem>>, %arg3: memref<80x16xbf16, #tpu.memory_space<vmem>>, %arg4: memref<1x16xf32, #tpu.memory_space<vmem>>, %arg5: memref<16x8xbf16, #tpu.memory_space<vmem>>, %arg6: memref<1x8xf32, #tpu.memory_space<vmem>>, %arg7: memref<1x16x16xbf16, #tpu.memory_space<vmem>>, %arg8: memref<1x16x8xf32, #tpu.memory_space<vmem>>) attributes {dimension_semantics = [#tpu.dimension_semantics<parallel>, #tpu.dimension_semantics<parallel>], iteration_bounds = array<i64: 2, 1>, scalar_prefetch = 0 : i64, scratch_operands = 0 : i64, tpu.core_type = #tpu.core_type<tc>, window_params = [{transform_indices = @transform_0, window_bounds = array<i64: 1, 16, 80>}, {pipeline_mode = #tpu.pipeline_mode<synchronous>, transform_indices = @transform_1, window_bounds = array<i64: 80, 16>}, {pipeline_mode = #tpu.pipeline_mode<synchronous>, transform_indices = @transform_2, window_bounds = array<i64: 1, 16>}, {pipeline_mode = #tpu.pipeline_mode<synchronous>, transform_indices = @transform_3, window_bounds = array<i64: 16, 8>}, {pipeline_mode = #tpu.pipeline_mode<synchronous>, transform_indices = @transform_4, window_bounds = array<i64: 1, 8>}, {transform_indices = @transform_5, window_bounds = array<i64: 1, 16, 16>}, {transform_indices = @transform_6, window_bounds = array<i64: 1, 16, 8>}]} {
    %c0 = arith.constant 0 : index
    %c0_0 = arith.constant 0 : index
    %c0_1 = arith.constant 0 : index
    %0 = vector.load %arg2[%c0, %c0_0, %c0_1] : memref<1x16x80xbf16, #tpu.memory_space<vmem>>, vector<1x16x80xbf16>
    %1 = vector.shape_cast %0 : vector<1x16x80xbf16> to vector<16x80xbf16>
    %c0_2 = arith.constant 0 : index
    %c0_3 = arith.constant 0 : index
    %2 = vector.load %arg3[%c0_2, %c0_3] : memref<80x16xbf16, #tpu.memory_space<vmem>>, vector<80x16xbf16>
    %cst = arith.constant dense<0.000000e+00> : vector<16x16xf32>
    %3 = tpu.matmul %1, %2, %cst {dimension_numbers = #tpu.dot_dimension_numbers<[1], [0], [0], [1], [0, 0, 1, 1], [], []>} : vector<16x80xbf16>, vector<80x16xbf16>, vector<16x16xf32> -> vector<16x16xf32>
    %c0_4 = arith.constant 0 : index
    %c0_5 = arith.constant 0 : index
    %4 = vector.load %arg4[%c0_4, %c0_5] : memref<1x16xf32, #tpu.memory_space<vmem>>, vector<1x16xf32>
    %5 = vector.broadcast %4 : vector<1x16xf32> to vector<16x16xf32>
    %6 = arith.addf %3, %5 : vector<16x16xf32>
    %7 = arith.negf %6 : vector<16x16xf32>
    %8 = math.exp %7 : vector<16x16xf32>
    %cst_6 = arith.constant 1.000000e+00 : f32
    %9 = vector.broadcast %cst_6 : f32 to vector<16x16xf32>
    %10 = arith.addf %9, %8 : vector<16x16xf32>
    %11 = arith.divf %9, %10 : vector<16x16xf32>
    %12 = arith.mulf %6, %11 : vector<16x16xf32>
    %13 = arith.truncf %12 : vector<16x16xf32> to vector<16x16xbf16>
    %c0_7 = arith.constant 0 : index
    %c0_8 = arith.constant 0 : index
    %c0_9 = arith.constant 0 : index
    %14 = vector.load %arg7[%c0_7, %c0_8, %c0_9] : memref<1x16x16xbf16, #tpu.memory_space<vmem>>, vector<1x16x16xbf16>
    %15 = vector.shape_cast %14 : vector<1x16x16xbf16> to vector<16x16xbf16>
    %16 = vector.shape_cast %13 : vector<16x16xbf16> to vector<1x16x16xbf16>
    tpu.vector_store %arg7[%c0_7, %c0_8, %c0_9], %16 {strides = array<i32>} : memref<1x16x16xbf16, #tpu.memory_space<vmem>>, vector<1x16x16xbf16>,
    %c0_10 = arith.constant 0 : index
    %c0_11 = arith.constant 0 : index
    %17 = vector.load %arg5[%c0_10, %c0_11] : memref<16x8xbf16, #tpu.memory_space<vmem>>, vector<16x8xbf16>
    %cst_12 = arith.constant dense<0.000000e+00> : vector<16x8xf32>
    %18 = tpu.matmul %13, %17, %cst_12 {dimension_numbers = #tpu.dot_dimension_numbers<[1], [0], [0], [1], [0, 0, 1, 1], [], []>} : vector<16x16xbf16>, vector<16x8xbf16>, vector<16x8xf32> -> vector<16x8xf32>
    %c0_13 = arith.constant 0 : index
    %c0_14 = arith.constant 0 : index
    %19 = vector.load %arg6[%c0_13, %c0_14] : memref<1x8xf32, #tpu.memory_space<vmem>>, vector<1x8xf32>
    %20 = vector.broadcast %19 : vector<1x8xf32> to vector<16x8xf32>
    %21 = arith.addf %18, %20 : vector<16x8xf32>
    %c0_15 = arith.constant 0 : index
    %c0_16 = arith.constant 0 : index
    %c0_17 = arith.constant 0 : index
    %22 = vector.load %arg8[%c0_15, %c0_16, %c0_17] : memref<1x16x8xf32, #tpu.memory_space<vmem>>, vector<1x16x8xf32>
    %23 = vector.shape_cast %22 : vector<1x16x8xf32> to vector<16x8xf32>
    %24 = vector.shape_cast %21 : vector<16x8xf32> to vector<1x16x8xf32>
    tpu.vector_store %arg8[%c0_15, %c0_16, %c0_17], %24 {strides = array<i32>} : memref<1x16x8xf32, #tpu.memory_space<vmem>>, vector<1x16x8xf32>,
    return
  }
  func.func @transform_0(%arg0: i32, %arg1: i32) -> (i32, i32, i32) {
    %c0_i32 = arith.constant 0 : i32
    %c0_i32_0 = arith.constant 0 : i32
    return %arg0, %arg1, %c0_i32 : i32, i32, i32
  }
  func.func @transform_1(%arg0: i32, %arg1: i32) -> (i32, i32) {
    %c0_i32 = arith.constant 0 : i32
    %c0_i32_0 = arith.constant 0 : i32
    %c0_i32_1 = arith.constant 0 : i32
    return %c0_i32, %c0_i32_0 : i32, i32
  }
  func.func @transform_2(%arg0: i32, %arg1: i32) -> (i32, i32) {
    %c0_i32 = arith.constant 0 : i32
    %c0_i32_0 = arith.constant 0 : i32
    %c0_i32_1 = arith.constant 0 : i32
    return %c0_i32, %c0_i32_0 : i32, i32
  }
  func.func @transform_3(%arg0: i32, %arg1: i32) -> (i32, i32) {
    %c0_i32 = arith.constant 0 : i32
    %c0_i32_0 = arith.constant 0 : i32
    %c0_i32_1 = arith.constant 0 : i32
    return %c0_i32, %c0_i32_0 : i32, i32
  }
  func.func @transform_4(%arg0: i32, %arg1: i32) -> (i32, i32) {
    %c0_i32 = arith.constant 0 : i32
    %c0_i32_0 = arith.constant 0 : i32
    %c0_i32_1 = arith.constant 0 : i32
    return %c0_i32, %c0_i32_0 : i32, i32
  }
  func.func @transform_5(%arg0: i32, %arg1: i32) -> (i32, i32, i32) {
    %c0_i32 = arith.constant 0 : i32
    %c0_i32_0 = arith.constant 0 : i32
    return %arg0, %arg1, %c0_i32 : i32, i32, i32
  }
  func.func @transform_6(%arg0: i32, %arg1: i32) -> (i32, i32, i32) {
    %c0_i32 = arith.constant 0 : i32
    %c0_i32_0 = arith.constant 0 : i32
    return %arg0, %arg1, %c0_i32 : i32, i32, i32
  }
}

module attributes {stable_mosaic.version = 11 : i64} {
  func.func @_stage_kernel(%arg0: i32, %arg1: i32, %arg2: memref<1x16x144xbf16, #tpu.memory_space<vmem>>, %arg3: memref<144x32xbf16, #tpu.memory_space<vmem>>, %arg4: memref<1x32xf32, #tpu.memory_space<vmem>>, %arg5: memref<32x8xbf16, #tpu.memory_space<vmem>>, %arg6: memref<1x8xf32, #tpu.memory_space<vmem>>, %arg7: memref<1x16x32xbf16, #tpu.memory_space<vmem>>, %arg8: memref<1x16x8xf32, #tpu.memory_space<vmem>>) attributes {dimension_semantics = [#tpu.dimension_semantics<parallel>, #tpu.dimension_semantics<parallel>], iteration_bounds = array<i64: 2, 1>, scalar_prefetch = 0 : i64, scratch_operands = 0 : i64, tpu.core_type = #tpu.core_type<tc>, window_params = [{transform_indices = @transform_0, window_bounds = array<i64: 1, 16, 144>}, {pipeline_mode = #tpu.pipeline_mode<synchronous>, transform_indices = @transform_1, window_bounds = array<i64: 144, 32>}, {pipeline_mode = #tpu.pipeline_mode<synchronous>, transform_indices = @transform_2, window_bounds = array<i64: 1, 32>}, {pipeline_mode = #tpu.pipeline_mode<synchronous>, transform_indices = @transform_3, window_bounds = array<i64: 32, 8>}, {pipeline_mode = #tpu.pipeline_mode<synchronous>, transform_indices = @transform_4, window_bounds = array<i64: 1, 8>}, {transform_indices = @transform_5, window_bounds = array<i64: 1, 16, 32>}, {transform_indices = @transform_6, window_bounds = array<i64: 1, 16, 8>}]} {
    %c0 = arith.constant 0 : index
    %c0_0 = arith.constant 0 : index
    %c0_1 = arith.constant 0 : index
    %0 = vector.load %arg2[%c0, %c0_0, %c0_1] : memref<1x16x144xbf16, #tpu.memory_space<vmem>>, vector<1x16x144xbf16>
    %1 = vector.shape_cast %0 : vector<1x16x144xbf16> to vector<16x144xbf16>
    %c0_2 = arith.constant 0 : index
    %c0_3 = arith.constant 0 : index
    %2 = vector.load %arg3[%c0_2, %c0_3] : memref<144x32xbf16, #tpu.memory_space<vmem>>, vector<144x32xbf16>
    %cst = arith.constant dense<0.000000e+00> : vector<16x32xf32>
    %3 = tpu.matmul %1, %2, %cst {dimension_numbers = #tpu.dot_dimension_numbers<[1], [0], [0], [1], [0, 0, 1, 1], [], []>} : vector<16x144xbf16>, vector<144x32xbf16>, vector<16x32xf32> -> vector<16x32xf32>
    %c0_4 = arith.constant 0 : index
    %c0_5 = arith.constant 0 : index
    %4 = vector.load %arg4[%c0_4, %c0_5] : memref<1x32xf32, #tpu.memory_space<vmem>>, vector<1x32xf32>
    %5 = vector.broadcast %4 : vector<1x32xf32> to vector<16x32xf32>
    %6 = arith.addf %3, %5 : vector<16x32xf32>
    %7 = arith.negf %6 : vector<16x32xf32>
    %8 = math.exp %7 : vector<16x32xf32>
    %cst_6 = arith.constant 1.000000e+00 : f32
    %9 = vector.broadcast %cst_6 : f32 to vector<16x32xf32>
    %10 = arith.addf %9, %8 : vector<16x32xf32>
    %11 = arith.divf %9, %10 : vector<16x32xf32>
    %12 = arith.mulf %6, %11 : vector<16x32xf32>
    %13 = arith.truncf %12 : vector<16x32xf32> to vector<16x32xbf16>
    %c0_7 = arith.constant 0 : index
    %c0_8 = arith.constant 0 : index
    %c0_9 = arith.constant 0 : index
    %14 = vector.load %arg7[%c0_7, %c0_8, %c0_9] : memref<1x16x32xbf16, #tpu.memory_space<vmem>>, vector<1x16x32xbf16>
    %15 = vector.shape_cast %14 : vector<1x16x32xbf16> to vector<16x32xbf16>
    %16 = vector.shape_cast %13 : vector<16x32xbf16> to vector<1x16x32xbf16>
    tpu.vector_store %arg7[%c0_7, %c0_8, %c0_9], %16 {strides = array<i32>} : memref<1x16x32xbf16, #tpu.memory_space<vmem>>, vector<1x16x32xbf16>,
    %c0_10 = arith.constant 0 : index
    %c0_11 = arith.constant 0 : index
    %17 = vector.load %arg5[%c0_10, %c0_11] : memref<32x8xbf16, #tpu.memory_space<vmem>>, vector<32x8xbf16>
    %cst_12 = arith.constant dense<0.000000e+00> : vector<16x8xf32>
    %18 = tpu.matmul %13, %17, %cst_12 {dimension_numbers = #tpu.dot_dimension_numbers<[1], [0], [0], [1], [0, 0, 1, 1], [], []>} : vector<16x32xbf16>, vector<32x8xbf16>, vector<16x8xf32> -> vector<16x8xf32>
    %c0_13 = arith.constant 0 : index
    %c0_14 = arith.constant 0 : index
    %19 = vector.load %arg6[%c0_13, %c0_14] : memref<1x8xf32, #tpu.memory_space<vmem>>, vector<1x8xf32>
    %20 = vector.broadcast %19 : vector<1x8xf32> to vector<16x8xf32>
    %21 = arith.addf %18, %20 : vector<16x8xf32>
    %c0_15 = arith.constant 0 : index
    %c0_16 = arith.constant 0 : index
    %c0_17 = arith.constant 0 : index
    %22 = vector.load %arg8[%c0_15, %c0_16, %c0_17] : memref<1x16x8xf32, #tpu.memory_space<vmem>>, vector<1x16x8xf32>
    %23 = vector.shape_cast %22 : vector<1x16x8xf32> to vector<16x8xf32>
    %24 = vector.shape_cast %21 : vector<16x8xf32> to vector<1x16x8xf32>
    tpu.vector_store %arg8[%c0_15, %c0_16, %c0_17], %24 {strides = array<i32>} : memref<1x16x8xf32, #tpu.memory_space<vmem>>, vector<1x16x8xf32>,
    return
  }
  func.func @transform_0(%arg0: i32, %arg1: i32) -> (i32, i32, i32) {
    %c0_i32 = arith.constant 0 : i32
    %c0_i32_0 = arith.constant 0 : i32
    return %arg0, %arg1, %c0_i32 : i32, i32, i32
  }
  func.func @transform_1(%arg0: i32, %arg1: i32) -> (i32, i32) {
    %c0_i32 = arith.constant 0 : i32
    %c0_i32_0 = arith.constant 0 : i32
    %c0_i32_1 = arith.constant 0 : i32
    return %c0_i32, %c0_i32_0 : i32, i32
  }
  func.func @transform_2(%arg0: i32, %arg1: i32) -> (i32, i32) {
    %c0_i32 = arith.constant 0 : i32
    %c0_i32_0 = arith.constant 0 : i32
    %c0_i32_1 = arith.constant 0 : i32
    return %c0_i32, %c0_i32_0 : i32, i32
  }
  func.func @transform_3(%arg0: i32, %arg1: i32) -> (i32, i32) {
    %c0_i32 = arith.constant 0 : i32
    %c0_i32_0 = arith.constant 0 : i32
    %c0_i32_1 = arith.constant 0 : i32
    return %c0_i32, %c0_i32_0 : i32, i32
  }
  func.func @transform_4(%arg0: i32, %arg1: i32) -> (i32, i32) {
    %c0_i32 = arith.constant 0 : i32
    %c0_i32_0 = arith.constant 0 : i32
    %c0_i32_1 = arith.constant 0 : i32
    return %c0_i32, %c0_i32_0 : i32, i32
  }
  func.func @transform_5(%arg0: i32, %arg1: i32) -> (i32, i32, i32) {
    %c0_i32 = arith.constant 0 : i32
    %c0_i32_0 = arith.constant 0 : i32
    return %arg0, %arg1, %c0_i32 : i32, i32, i32
  }
  func.func @transform_6(%arg0: i32, %arg1: i32) -> (i32, i32, i32) {
    %c0_i32 = arith.constant 0 : i32
    %c0_i32_0 = arith.constant 0 : i32
    return %arg0, %arg1, %c0_i32 : i32, i32, i32
  }
}

</mosaic_0001>

<llo_original>
// kernel: yolox_forward.3
$region0: #{yolox_forward.3}
  #allocation0 [shape = 'u32[]', space=smem, size = 0x4, offset = 0x4, fixed_abs, tag = 'smem constant byte address 0x4 - core index']
  #allocation1 [shape = 'u32[144,128]{1,0:T(1,128)}', space=vmem, size = 0x12000, scoped, tag = 'internal scratch']
  %s0 = inlined_call_operand.vmem [shape: bf16[2,64,48], index: 0, kind: input, shape index: {}]
  %s1 = inlined_call_operand.vmem [shape: bf16[48,8], index: 1, kind: input, shape index: {}]
  %s2 = inlined_call_operand.vmem [shape: f32[1,8], index: 2, kind: input, shape index: {}]
  %s3 = inlined_call_operand.vmem [shape: bf16[8,8], index: 3, kind: input, shape index: {}]
  %s4 = inlined_call_operand.vmem [shape: f32[1,8], index: 4, kind: input, shape index: {}]
  %s5 = inlined_call_operand.vmem [shape: bf16[2,64,8], index: 5, kind: output, shape index: {0}]
  %s6 = inlined_call_operand.vmem [shape: f32[2,64,8], index: 6, kind: output, shape index: {1}]
  %7 = xla_tuple %s5, %s6
  %s8 = sld [smem:[#allocation0]]
  $region61: #{yolox_forward.3} parent=0
    _
  %s10 = ssub.s32 1, %s8
  %s11 = scalar_select 0, %s10, %s8
  loop: start=0, step=1, limit=4
  $region2: #{yolox_forward.3} parent=0 // loop_pre_header
    _
  $region3: #{yolox_forward.3} parent=0 // loop_header
    %s13 = sphi 0, %s17
    %p14 = scmp.ge.s32.totalorder %s13, 4
    %s20 = sphi 0, %s32
    %s21 = sphi 0, %s28
    %s22 = sphi 0, %s20
    %s23 = sphi 0, %s21
    %s24 = sphi 0, %s22
    %s25 = sphi 0, %s23
    %s37 = sphi 0, %s39
    %s40 = sphi 0, %s37
    %s41 = sphi 0, %s40
    %s57 = sphi 0, %s41
    %s61 = sphi 0, %s61
    %s63 = sphi 0, %s61
    %s64 = sphi 0, %s63
    %s78 = sphi 0, %s64
    %s82 = sphi 0, %s82
    %s84 = sphi 0, %s82
    %s85 = sphi 0, %s84
    %s99 = sphi 0, %s85
    %s103 = sphi 0, %s103
    %s105 = sphi 0, %s103
    %s106 = sphi 0, %s105
    %s120 = sphi 0, %s106
    %s124 = sphi 0, %s124
    %s126 = sphi 0, %s124
    %s127 = sphi 0, %s126
    %s141 = sphi 0, %s127
    %s149 = sphi 0, %s151
    %s152 = sphi 0, %s149
    %s153 = sphi 0, %s152
    %s169 = sphi 0, %s153
    %s177 = sphi 0, %s179
    %s180 = sphi 0, %s177
    %s181 = sphi 0, %s180
    %s197 = sphi 0, %s181
  $region4: #{yolox_forward.3} parent=0 // loop_header_branch
    %16 = sbr.rel (%p14) target = $region8
  $region5: #{yolox_forward.3} parent=0 // loop_body
    %s18 = ssub.s32 %s13, 1
    %s19 = ssub.s32 %s13, 2
    %s26 = sadd.s32 1, %s21
    %p27 = scmp.ge.s32.totalorder %s26, 1
    %s28 = scalar_select %p27, 0, %s26
    %s29 = sadd.s32 1, %s20
    %s30 = scalar_select %p27, %s29, %s20
    %p31 = scmp.ge.s32.totalorder %s30, 2
    %s32 = scalar_select %p31, 0, %s30
    %s33 = ssub.s32 %s20, %s32
    %s34 = ssub.s32 %s21, %s28
    %s35 = sor.u32 %s33, %s34
    %p36 = scmp.eq.s32.totalorder %s35, 0
    %s38 = sadd.s32 %s37, 1
    %s39 = scalar_select %p36, %s37, %s38
    %p42 = pneg %p36
    %p43 = scmp.eq.s32.totalorder %s13, 1
    %p44 = por %p42, %p43
    %p45 = scmp.ne.s32.totalorder %s37, %s40
    %p46 = scmp.eq.s32.totalorder %s13, 0
    %p47 = por %p45, %p46
    %p48 = scmp.ne.s32.totalorder %s37, %s40
    %p49 = scmp.eq.s32.totalorder %s18, 1
    %p50 = por %p48, %p49
    %p51 = scmp.ne.s32.totalorder %s40, %s41
    %p52 = scmp.eq.s32.totalorder %s18, 0
    %p53 = por %p51, %p52
    %p54 = scmp.ne.s32.totalorder %s40, %s41
    %p55 = scmp.eq.s32.totalorder %s19, 1
    %p56 = por %p54, %p55
    %p58 = scmp.ne.s32.totalorder %s41, %s57
    %p59 = scmp.eq.s32.totalorder %s19, 0
    %p60 = por %p58, %p59
    %s62 = sadd.s32 %s61, 1
    %p65 = scmp.eq.s32.totalorder %s13, 1
    %p66 = scmp.ne.s32.totalorder %s61, %s63
    %p67 = scmp.eq.s32.totalorder %s13, 0
    %p68 = por %p66, %p67
    %p69 = scmp.ne.s32.totalorder %s61, %s63
    %p70 = scmp.eq.s32.totalorder %s18, 1
    %p71 = por %p69, %p70
    %p72 = scmp.ne.s32.totalorder %s63, %s64
    %p73 = scmp.eq.s32.totalorder %s18, 0
    %p74 = por %p72, %p73
    %p75 = scmp.ne.s32.totalorder %s63, %s64
    %p76 = scmp.eq.s32.totalorder %s19, 1
    %p77 = por %p75, %p76
    %p79 = scmp.ne.s32.totalorder %s64, %s78
    %p80 = scmp.eq.s32.totalorder %s19, 0
    %p81 = por %p79, %p80
    %s83 = sadd.s32 %s82, 1
    %p86 = scmp.eq.s32.totalorder %s13, 1
    %p87 = scmp.ne.s32.totalorder %s82, %s84
    %p88 = scmp.eq.s32.totalorder %s13, 0
    %p89 = por %p87, %p88
    %p90 = scmp.ne.s32.totalorder %s82, %s84
    %p91 = scmp.eq.s32.totalorder %s18, 1
    %p92 = por %p90, %p91
    %p93 = scmp.ne.s32.totalorder %s84, %s85
    %p94 = scmp.eq.s32.totalorder %s18, 0
    %p95 = por %p93, %p94
    %p96 = scmp.ne.s32.totalorder %s84, %s85
    %p97 = scmp.eq.s32.totalorder %s19, 1
    %p98 = por %p96, %p97
    %p100 = scmp.ne.s32.totalorder %s85, %s99
    %p101 = scmp.eq.s32.totalorder %s19, 0
    %p102 = por %p100, %p101
    %s104 = sadd.s32 %s103, 1
    %p107 = scmp.eq.s32.totalorder %s13, 1
    %p108 = scmp.ne.s32.totalorder %s103, %s105
    %p109 = scmp.eq.s32.totalorder %s13, 0
    %p110 = por %p108, %p109
    %p111 = scmp.ne.s32.totalorder %s103, %s105
    %p112 = scmp.eq.s32.totalorder %s18, 1
    %p113 = por %p111, %p112
    %p114 = scmp.ne.s32.totalorder %s105, %s106
    %p115 = scmp.eq.s32.totalorder %s18, 0
    %p116 = por %p114, %p115
    %p117 = scmp.ne.s32.totalorder %s105, %s106
    %p118 = scmp.eq.s32.totalorder %s19, 1
    %p119 = por %p117, %p118
    %p121 = scmp.ne.s32.totalorder %s106, %s120
    %p122 = scmp.eq.s32.totalorder %s19, 0
    %p123 = por %p121, %p122
    %s125 = sadd.s32 %s124, 1
    %p128 = scmp.eq.s32.totalorder %s13, 1
    %p129 = scmp.ne.s32.totalorder %s124, %s126
    %p130 = scmp.eq.s32.totalorder %s13, 0
    %p131 = por %p129, %p130
    %p132 = scmp.ne.s32.totalorder %s124, %s126
    %p133 = scmp.eq.s32.totalorder %s18, 1
    %p134 = por %p132, %p133
    %p135 = scmp.ne.s32.totalorder %s126, %s127
    %p136 = scmp.eq.s32.totalorder %s18, 0
    %p137 = por %p135, %p136
    %p138 = scmp.ne.s32.totalorder %s126, %s127
    %p139 = scmp.eq.s32.totalorder %s19, 1
    %p140 = por %p138, %p139
    %p142 = scmp.ne.s32.totalorder %s127, %s141
    %p143 = scmp.eq.s32.totalorder %s19, 0
    %p144 = por %p142, %p143
    %s145 = ssub.s32 %s20, %s32
    %s146 = ssub.s32 %s21, %s28
    %s147 = sor.u32 %s145, %s146
    %p148 = scmp.eq.s32.totalorder %s147, 0
    %s150 = sadd.s32 %s149, 1
    %s151 = scalar_select %p148, %s149, %s150
    %p154 = pneg %p148
    %p155 = scmp.eq.s32.totalorder %s13, 1
    %p156 = por %p154, %p155
    %p157 = scmp.ne.s32.totalorder %s149, %s152
    %p158 = scmp.eq.s32.totalorder %s13, 0
    %p159 = por %p157, %p158
    %p160 = scmp.ne.s32.totalorder %s149, %s152
    %p161 = scmp.eq.s32.totalorder %s18, 1
    %p162 = por %p160, %p161
    %p163 = scmp.ne.s32.totalorder %s152, %s153
    %p164 = scmp.eq.s32.totalorder %s18, 0
    %p165 = por %p163, %p164
    %p166 = scmp.ne.s32.totalorder %s152, %s153
    %p167 = scmp.eq.s32.totalorder %s19, 1
    %p168 = por %p166, %p167
    %p170 = scmp.ne.s32.totalorder %s153, %s169
    %p171 = scmp.eq.s32.totalorder %s19, 0
    %p172 = por %p170, %p171
    %s173 = ssub.s32 %s20, %s32
    %s174 = ssub.s32 %s21, %s28
    %s175 = sor.u32 %s173, %s174
    %p176 = scmp.eq.s32.totalorder %s175, 0
    %s178 = sadd.s32 %s177, 1
    %s179 = scalar_select %p176, %s177, %s178
    %p182 = pneg %p176
    %p183 = scmp.eq.s32.totalorder %s13, 1
    %p184 = por %p182, %p183
    %p185 = scmp.ne.s32.totalorder %s177, %s180
    %p186 = scmp.eq.s32.totalorder %s13, 0
    %p187 = por %p185, %p186
    %p188 = scmp.ne.s32.totalorder %s177, %s180
    %p189 = scmp.eq.s32.totalorder %s18, 1
    %p190 = por %p188, %p189
    %p191 = scmp.ne.s32.totalorder %s180, %s181
    %p192 = scmp.eq.s32.totalorder %s18, 0
    %p193 = por %p191, %p192
    %p194 = scmp.ne.s32.totalorder %s180, %s181
    %p195 = scmp.eq.s32.totalorder %s19, 1
    %p196 = por %p194, %p195
    %p198 = scmp.ne.s32.totalorder %s181, %s197
    %p199 = scmp.eq.s32.totalorder %s19, 0
    %p200 = por %p198, %p199
    %p201 = scmp.le.s32.totalorder 1, %s13
    %p202 = scmp.lt.s32.totalorder %s13, 3
    %p203 = pnand %p201, %p202
    %p204 = pneg %p203
    // Predicated region
    $region9: #{yolox_forward.3} parent=5 // pred_check
      _
    $region10: #{yolox_forward.3} parent=5 // pred_check_branch
      %206 = sbr.rel (%p203) target = $region12
    $region11: #{yolox_forward.3} parent=5 // pred_region
      %s207 = ssub.s32 %s13, 1
      // Predicated region
      $region13: #{yolox_forward.3} parent=11 // pred_check
        %p208 = pneg %p74
      $region14: #{yolox_forward.3} parent=11 // pred_check_branch
        %210 = sbr.rel (%p208) target = $region16
      $region15: #{yolox_forward.3} parent=11 // pred_region
        _
      $region16: #{yolox_forward.3} parent=11 // pred_fallthru
        _
      // Predicated region
      $region17: #{yolox_forward.3} parent=11 // pred_check
        %p211 = pneg %p95
      $region18: #{yolox_forward.3} parent=11 // pred_check_branch
        %213 = sbr.rel (%p211) target = $region20
      $region19: #{yolox_forward.3} parent=11 // pred_region
        _
      $region20: #{yolox_forward.3} parent=11 // pred_fallthru
        _
      // Predicated region
      $region21: #{yolox_forward.3} parent=11 // pred_check
        %p214 = pneg %p116
      $region22: #{yolox_forward.3} parent=11 // pred_check_branch
        %216 = sbr.rel (%p214) target = $region24
      $region23: #{yolox_forward.3} parent=11 // pred_region
        _
      $region24: #{yolox_forward.3} parent=11 // pred_fallthru
        _
      // Predicated region
      $region25: #{yolox_forward.3} parent=11 // pred_check
        %p217 = pneg %p137
      $region26: #{yolox_forward.3} parent=11 // pred_check_branch
        %219 = sbr.rel (%p217) target = $region28
      $region27: #{yolox_forward.3} parent=11 // pred_region
        _
      $region28: #{yolox_forward.3} parent=11 // pred_fallthru
        _
    $region12: #{yolox_forward.3} parent=5 // pred_fallthru
      _
    %p220 = scmp.lt.s32.totalorder %s13, 2
    // Predicated region
    $region29: #{yolox_forward.3} parent=5 // pred_check
      %p221 = pneg %p220
    $region30: #{yolox_forward.3} parent=5 // pred_check_branch
      %223 = sbr.rel (%p221) target = $region32
    $region31: #{yolox_forward.3} parent=5 // pred_region
      // Predicated region
      $region33: #{yolox_forward.3} parent=31 // pred_check
        %p224 = pneg %p47
      $region34: #{yolox_forward.3} parent=31 // pred_check_branch
        %226 = sbr.rel (%p224) target = $region36
      $region35: #{yolox_forward.3} parent=31 // pred_region
        %s227 = smul.u32 8, %s21
        %p228 = scmp.lt.s32.totalorder %s20, 1
        %s229 = scalar_select %p228, %s20, 1
        %p230 = scmp.lt.s32.totalorder %s227, 7
        %s231 = scalar_select %p230, %s227, 7
        %s232 = smul.addr %s229, 8
        %s233 = sadd.s32 %s231, %s232
        %s234 = smul.addr %s233, 4
        %s235 = scalar_lea.vmem %s0, %s234
        %s236 = smul.u32 8, %s21
      $region36: #{yolox_forward.3} parent=31 // pred_fallthru
        _
    $region32: #{yolox_forward.3} parent=5 // pred_fallthru
      _
    %p237 = scmp.le.s32.totalorder 1, %s13
    %p238 = scmp.lt.s32.totalorder %s13, 3
    %p239 = pnand %p237, %p238
    %p240 = pneg %p239
    // Predicated region
    $region37: #{yolox_forward.3} parent=5 // pred_check
      _
    $region38: #{yolox_forward.3} parent=5 // pred_check_branch
      %242 = sbr.rel (%p239) target = $region40
    $region39: #{yolox_forward.3} parent=5 // pred_region
      %s243 = ssub.s32 %s13, 1
      %s244 = smul.u32 8, %s23
      %p245 = scmp.lt.s32.totalorder %s22, 1
      %s246 = scalar_select %p245, %s22, 1
      %p247 = scmp.lt.s32.totalorder %s244, 7
      %s248 = scalar_select %p247, %s244, 7
      %s249 = smul.addr %s246, 8
      %s250 = sadd.s32 %s248, %s249
      %s251 = smul.addr %s250, 4
      %s252 = scalar_lea.vmem %s0, %s251
      %p253 = pneg %p53
      %p254 = pneg %p50
      %p255 = pneg %p74
      %p256 = pneg %p71
      %p257 = pneg %p95
      %p258 = pneg %p92
      %p259 = pneg %p116
      %p260 = pneg %p113
      %p261 = pneg %p137
      %p262 = pneg %p134
      %p263 = pneg %p165
      %p264 = pneg %p162
      %s265 = smul.u32 8, %s23
      %p266 = scmp.lt.s32.totalorder %s22, 1
      %s267 = scalar_select %p266, %s22, 1
      %p268 = scmp.lt.s32.totalorder %s265, 7
      %s269 = scalar_select %p268, %s265, 7
      %s270 = smul.addr %s267, 8
      %s271 = sadd.s32 %s269, %s270
      %s272 = smul.addr %s271, 4
      %s273 = scalar_lea.vmem %s5, %s272
      %p274 = pneg %p193
      %p275 = pneg %p190
      %s276 = smul.u32 8, %s23
      %p277 = scmp.lt.s32.totalorder %s22, 1
      %s278 = scalar_select %p277, %s22, 1
      %p279 = scmp.lt.s32.totalorder %s276, 7
      %s280 = scalar_select %p279, %s276, 7
      %s281 = smul.addr %s278, 8
      %s282 = sadd.s32 %s280, %s281
      %s283 = smul.addr %s282, 8
      %s284 = scalar_lea.vmem %s6, %s283
      %s285 = smul.u32 8, %s23
      %p286 = scmp.lt.s32.totalorder %s22, 1
      %s287 = scalar_select %p286, %s22, 1
      %p288 = scmp.lt.s32.totalorder %s285, 7
      %s289 = scalar_select %p288, %s285, 7
      %s290 = smul.addr %s287, 8
      %s291 = sadd.s32 %s289, %s290
      %s292 = smul.addr %s291, 4
      %s293 = scalar_lea.vmem %s0, %s292
      %s294 = smul.u32 8, %s23
      %s295 = smul.u32 8, %s23
      %p296 = scmp.lt.s32.totalorder %s22, 1
      %s297 = scalar_select %p296, %s22, 1
      %p298 = scmp.lt.s32.totalorder %s295, 7
      %s299 = scalar_select %p298, %s295, 7
      %s300 = smul.addr %s297, 8
      %s301 = sadd.s32 %s299, %s300
      %s302 = smul.addr %s301, 4
      %s303 = scalar_lea.vmem %s5, %s302
      %s304 = smul.u32 8, %s23
      %s305 = smul.u32 8, %s23
      %p306 = scmp.lt.s32.totalorder %s22, 1
      %s307 = scalar_select %p306, %s22, 1
      %p308 = scmp.lt.s32.totalorder %s305, 7
      %s309 = scalar_select %p308, %s305, 7
      %s310 = smul.addr %s307, 8
      %s311 = sadd.s32 %s309, %s310
      %s312 = smul.addr %s311, 8
      %s313 = scalar_lea.vmem %s6, %s312
      %s314 = smul.u32 8, %s23
      %v316 = vld [vmem:[%s293] sm:$0xf]
      %v317 = vld [vmem:[%s293 + $0x4] sm:$0xf]
      %v318 = vld [vmem:[%s293 + $0x8] sm:$0xf]
      %v319 = vld [vmem:[%s293 + $0xc] sm:$0xf]
      %v320 = vld [vmem:[%s293 + $0x10] sm:$0xf]
      %v321 = vld [vmem:[%s293 + $0x14] sm:$0xf]
      %v322 = vld [vmem:[%s293 + $0x18] sm:$0xf]
      %v323 = vld [vmem:[%s293 + $0x1c] sm:$0xf]
      %v324 = vld [vmem:[%s1] sm:$0xf]
      %v325 = vld [vmem:[%s1 + $0x4] sm:$0xf]
      %v326 = vld [vmem:[%s1 + $0x8] sm:$0xf]
      %v327 = vld [vmem:[%s1 + $0xc] sm:$0xf]
      %v328 = vld [vmem:[%s1 + $0x10] sm:$0xf]
      %v329 = vld [vmem:[%s1 + $0x14] sm:$0xf]
      %v330 = vld [vmem:[%s2] sm:$0x1]
      %v332 = vlaneseq
      %v333 = vshrl.u32 %v332, 7
      %v334 = vsub.s32 0, %v333
      %v335 = vrot.slane %v330, %v334
      %v345 = vunpack.c.l.b16 %v316
      %v346 = vunpack.c.l.b16 %v317
      %v347 = vunpack.c.l.b16 %v318
      %v348 = vunpack.c.l.b16 %v319
      %v349 = vunpack.c.l.b16 %v320
      %v350 = vunpack.c.l.b16 %v321
      %v351 = vunpack.c.l.b16 %v322
      %v352 = vunpack.c.l.b16 %v323
      %v353 = vpack.c.b16 %v346, %v345
      %v354 = vpack.c.b16 %v348, %v347
      %v355 = vpack.c.b16 %v350, %v349
      %v356 = vpack.c.b16 %v352, %v351
      %v363 = vunpack.c.l.b16 %v324
      %v364 = vunpack.c.l.b16 %v325
      %v365 = vunpack.c.l.b16 %v326
      %v366 = vunpack.c.l.b16 %v327
      %v367 = vunpack.c.l.b16 %v328
      %v368 = vunpack.c.l.b16 %v329
      %v369 = vpack.c.b16 %v364, %v363
      %v370 = vpack.c.b16 %v366, %v365
      %v371 = vpack.c.b16 %v368, %v367
      %vm375 = vcmask 392192
      %v377 = vsel %vm375, %v353, 0
      %v380 = vsel %vm375, %v354, 0
      %v383 = vsel %vm375, %v355, 0
      %v386 = vsel %vm375, %v356, 0
      %388 = vmatprep.subr.bf16.mxu0 0
      %389 = vmatpush1.bf16.msra.mxu0 %v369
      %390 = vmatprep.subr.bf16.mxu0 0
      %391 = vmatpush1.bf16.msra.mxu0 %v370
      %392 = vmatprep.subr.bf16.mxu0 0
      %393 = vmatpush1.bf16.msra.mxu0 %v371
      %394 = vmatprep.subr.bf16.mxu0 0
      %395 = vmatpush1.bf16.msra.mxu0 0
      %396 = vmatprep.subr.bf16.mxu0 0
      %397 = vmatpush1.bf16.msra.mxu0 0
      %398 = vmatprep.subr.bf16.mxu0 0
      %399 = vmatpush1.bf16.msra.mxu0 0
      %400 = vmatprep.subr.bf16.mxu0 0
      %401 = vmatpush1.bf16.msra.mxu0 0
      %402 = vmatprep.subr.bf16.mxu0 0
      %403 = vmatpush1.bf16.msra.mxu0 0
      %404 = vmatprep.subr.bf16.mxu0 0
      %405 = vmatpush1.bf16.msra.mxu0 0
      %406 = vmatprep.subr.bf16.mxu0 0
      %407 = vmatpush1.bf16.msra.mxu0 0
      %408 = vmatprep.subr.bf16.mxu0 0
      %409 = vmatpush1.bf16.msra.mxu0 0
      %410 = vmatprep.subr.bf16.mxu0 0
      %411 = vmatpush1.bf16.msra.mxu0 0
      %412 = vmatprep.subr.bf16.mxu0 0
      %413 = vmatpush1.bf16.msra.mxu0 0
      %414 = vmatprep.subr.bf16.mxu0 0
      %415 = vmatpush1.bf16.msra.mxu0 0
      %416 = vmatprep.subr.bf16.mxu0 0
      %417 = vmatpush1.bf16.msra.mxu0 0
      %418 = vmatprep.subr.bf16.mxu0 0
      %419 = vmatpush1.bf16.msra.mxu0 0
      %420 = vmatprep.mubr.bf16.mxu0 0
      %421 = vmatmul.mubr.bf16.gmra.mrb[0].mxu0 %v377
      %v422 = vpop.f32.mrb[0].mxu0
      %v423 = vadd.f32 %v335, %v422
      %v424 = vpop.f32.mrb[0].mxu0
      %v425 = vpop.f32.mrb[0].mxu0
      %v426 = vadd.f32 %v335, %v425
      %v427 = vpop.f32.mrb[0].mxu0
      %428 = vmatprep.mubr.bf16.mxu0 0
      %429 = vmatmul.mubr.bf16.gmra.mrb[0].mxu0 %v380
      %v430 = vpop.f32.mrb[0].mxu0
      %v431 = vadd.f32 %v335, %v430
      %v432 = vpop.f32.mrb[0].mxu0
      %v433 = vpop.f32.mrb[0].mxu0
      %v434 = vadd.f32 %v335, %v433
      %v435 = vpop.f32.mrb[0].mxu0
      %436 = vmatprep.mubr.bf16.mxu0 0
      %437 = vmatmul.mubr.bf16.gmra.mrb[0].mxu0 %v383
      %v438 = vpop.f32.mrb[0].mxu0
      %v439 = vadd.f32 %v335, %v438
      %v440 = vpop.f32.mrb[0].mxu0
      %v441 = vpop.f32.mrb[0].mxu0
      %v442 = vadd.f32 %v335, %v441
      %v443 = vpop.f32.mrb[0].mxu0
      %444 = vmatprep.mubr.bf16.mxu0 0
      %445 = vmatmul.mubr.bf16.gmra.mrb[0].mxu0 %v386
      %v446 = vpop.f32.mrb[0].mxu0
      %v447 = vadd.f32 %v335, %v446
      %v448 = vpop.f32.mrb[0].mxu0
      %v449 = vpop.f32.mrb[0].mxu0
      %v450 = vadd.f32 %v335, %v449
      %v451 = vpop.f32.mrb[0].mxu0
      %452 = vdwg.mxu0
      %v453 = vxor.u32 %v423, 2147483648
      %v454 = vxor.u32 %v426, 2147483648
      %v455 = vxor.u32 %v431, 2147483648
      %v456 = vxor.u32 %v434, 2147483648
      %v457 = vxor.u32 %v439, 2147483648
      %v458 = vxor.u32 %v442, 2147483648
      %v459 = vxor.u32 %v447, 2147483648
      %v460 = vxor.u32 %v450, 2147483648
      %v461 = vmul.f32 %v453, 1.442695
      %v462 = vpow.pop %v461
      %v463 = vmul.f32 %v454, 1.442695
      %v464 = vpow.pop %v463
      %v465 = vmul.f32 %v455, 1.442695
      %v466 = vpow.pop %v465
      %v467 = vmul.f32 %v456, 1.442695
      %v468 = vpow.pop %v467
      %v469 = vmul.f32 %v457, 1.442695
      %v470 = vpow.pop %v469
      %v471 = vmul.f32 %v458, 1.442695
      %v472 = vpow.pop %v471
      %v473 = vmul.f32 %v459, 1.442695
      %v474 = vpow.pop %v473
      %v475 = vmul.f32 %v460, 1.442695
      %v476 = vpow.pop %v475
      %v477 = vadd.f32 %v462, 1.0
      %v478 = vadd.f32 %v464, 1.0
      %v479 = vadd.f32 %v466, 1.0
      %v480 = vadd.f32 %v468, 1.0
      %v481 = vadd.f32 %v470, 1.0
      %v482 = vadd.f32 %v472, 1.0
      %v483 = vadd.f32 %v474, 1.0
      %v484 = vadd.f32 %v476, 1.0
      %v485 = vrcp.pop %v477
      %v486 = vmul.f32 1.0, %v485
      %v487 = vrcp.pop %v478
      %v488 = vmul.f32 1.0, %v487
      %v489 = vrcp.pop %v479
      %v490 = vmul.f32 1.0, %v489
      %v491 = vrcp.pop %v480
      %v492 = vmul.f32 1.0, %v491
      %v493 = vrcp.pop %v481
      %v494 = vmul.f32 1.0, %v493
      %v495 = vrcp.pop %v482
      %v496 = vmul.f32 1.0, %v495
      %v497 = vrcp.pop %v483
      %v498 = vmul.f32 1.0, %v497
      %v499 = vrcp.pop %v484
      %v500 = vmul.f32 1.0, %v499
      %v501 = vmul.f32 %v423, %v486
      %v502 = vmul.f32 %v426, %v488
      %v503 = vmul.f32 %v431, %v490
      %v504 = vmul.f32 %v434, %v492
      %v505 = vmul.f32 %v439, %v494
      %v506 = vmul.f32 %v442, %v496
      %v507 = vmul.f32 %v447, %v498
      %v508 = vmul.f32 %v450, %v500
      %v509 = vpack.c.bf16 %v502, %v501
      %v510 = vpack.c.bf16 %v504, %v503
      %v511 = vpack.c.bf16 %v506, %v505
      %v512 = vpack.c.bf16 %v508, %v507
      %v517 = vunpack.c.l.b16 %v509
      %v518 = vunpack.c.h.b16 %v509
      %v519 = vunpack.c.l.b16 %v510
      %v520 = vunpack.c.h.b16 %v510
      %v521 = vunpack.c.l.b16 %v511
      %v522 = vunpack.c.h.b16 %v511
      %v523 = vunpack.c.l.b16 %v512
      %v524 = vunpack.c.h.b16 %v512
      %v525 = vpack.c.b16 %v517, %v517
      %v526 = vpack.c.b16 %v518, %v518
      %v527 = vpack.c.b16 %v519, %v519
      %v528 = vpack.c.b16 %v520, %v520
      %v529 = vpack.c.b16 %v521, %v521
      %v530 = vpack.c.b16 %v522, %v522
      %v531 = vpack.c.b16 %v523, %v523
      %v532 = vpack.c.b16 %v524, %v524
      %vm541 = vcmask 60416
      %542 = vst.msk [vmem:[%s303] sm:$0xf] %vm541, %v525
      %543 = vst.msk [vmem:[%s303 + $0x4] sm:$0xf] %vm541, %v526
      %544 = vst.msk [vmem:[%s303 + $0x8] sm:$0xf] %vm541, %v527
      %545 = vst.msk [vmem:[%s303 + $0xc] sm:$0xf] %vm541, %v528
      %546 = vst.msk [vmem:[%s303 + $0x10] sm:$0xf] %vm541, %v529
      %547 = vst.msk [vmem:[%s303 + $0x14] sm:$0xf] %vm541, %v530
      %548 = vst.msk [vmem:[%s303 + $0x18] sm:$0xf] %vm541, %v531
      %549 = vst.msk [vmem:[%s303 + $0x1c] sm:$0xf] %vm541, %v532
      %v550 = vld [vmem:[%s3] sm:$0xf]
      %v551 = vld [vmem:[%s4] sm:$0x1]
      %v553 = vlaneseq
      %v554 = vshrl.u32 %v553, 7
      %v555 = vsub.s32 0, %v554
      %v556 = vrot.slane %v551, %v555
      %vm558 = vcmask 64512
      %v560 = vsel %vm558, %v509, 0
      %v563 = vsel %vm558, %v510, 0
      %v566 = vsel %vm558, %v511, 0
      %v569 = vsel %vm558, %v512, 0
      %vm571 = vcmask 1043456
      %v573 = vsel %vm571, %v550, 0
      %575 = vmatprep.subr.bf16.mxu0 0
      %576 = vmatpush1.bf16.msra.mxu0 %v573
      %577 = vmatprep.subr.bf16.mxu0 0
      %578 = vmatpush1.bf16.msra.mxu0 0
      %579 = vmatprep.subr.bf16.mxu0 0
      %580 = vmatpush1.bf16.msra.mxu0 0
      %581 = vmatprep.subr.bf16.mxu0 0
      %582 = vmatpush1.bf16.msra.mxu0 0
      %583 = vmatprep.subr.bf16.mxu0 0
      %584 = vmatpush1.bf16.msra.mxu0 0
      %585 = vmatprep.subr.bf16.mxu0 0
      %586 = vmatpush1.bf16.msra.mxu0 0
      %587 = vmatprep.subr.bf16.mxu0 0
      %588 = vmatpush1.bf16.msra.mxu0 0
      %589 = vmatprep.subr.bf16.mxu0 0
      %590 = vmatpush1.bf16.msra.mxu0 0
      %591 = vmatprep.subr.bf16.mxu0 0
      %592 = vmatpush1.bf16.msra.mxu0 0
      %593 = vmatprep.subr.bf16.mxu0 0
      %594 = vmatpush1.bf16.msra.mxu0 0
      %595 = vmatprep.subr.bf16.mxu0 0
      %596 = vmatpush1.bf16.msra.mxu0 0
      %597 = vmatprep.subr.bf16.mxu0 0
      %598 = vmatpush1.bf16.msra.mxu0 0
      %599 = vmatprep.subr.bf16.mxu0 0
      %600 = vmatpush1.bf16.msra.mxu0 0
      %601 = vmatprep.subr.bf16.mxu0 0
      %602 = vmatpush1.bf16.msra.mxu0 0
      %603 = vmatprep.subr.bf16.mxu0 0
      %604 = vmatpush1.bf16.msra.mxu0 0
      %605 = vmatprep.subr.bf16.mxu0 0
      %606 = vmatpush1.bf16.msra.mxu0 0
      %607 = vmatprep.mubr.bf16.mxu0 0
      %608 = vmatmul.mubr.bf16.gmra.mrb[0].mxu0 %v560
      %v609 = vpop.f32.mrb[0].mxu0
      %v610 = vadd.f32 %v556, %v609
      %v611 = vpop.f32.mrb[0].mxu0
      %v612 = vpop.f32.mrb[0].mxu0
      %v613 = vadd.f32 %v556, %v612
      %v614 = vpop.f32.mrb[0].mxu0
      %615 = vmatprep.mubr.bf16.mxu0 0
      %616 = vmatmul.mubr.bf16.gmra.mrb[0].mxu0 %v563
      %v617 = vpop.f32.mrb[0].mxu0
      %v618 = vadd.f32 %v556, %v617
      %v619 = vpop.f32.mrb[0].mxu0
      %v620 = vpop.f32.mrb[0].mxu0
      %v621 = vadd.f32 %v556, %v620
      %v622 = vpop.f32.mrb[0].mxu0
      %623 = vmatprep.mubr.bf16.mxu0 0
      %624 = vmatmul.mubr.bf16.gmra.mrb[0].mxu0 %v566
      %v625 = vpop.f32.mrb[0].mxu0
      %v626 = vadd.f32 %v556, %v625
      %v627 = vpop.f32.mrb[0].mxu0
      %v628 = vpop.f32.mrb[0].mxu0
      %v629 = vadd.f32 %v556, %v628
      %v630 = vpop.f32.mrb[0].mxu0
      %631 = vmatprep.mubr.bf16.mxu0 0
      %632 = vmatmul.mubr.bf16.gmra.mrb[0].mxu0 %v569
      %v633 = vpop.f32.mrb[0].mxu0
      %v634 = vadd.f32 %v556, %v633
      %v635 = vpop.f32.mrb[0].mxu0
      %v636 = vpop.f32.mrb[0].mxu0
      %v637 = vadd.f32 %v556, %v636
      %v638 = vpop.f32.mrb[0].mxu0
      %639 = vdwg.mxu0
      %640 = vst.msk [vmem:[%s313] sm:$0xff] %vm558, %v610
      %641 = vst.msk [vmem:[%s313 + $0x8] sm:$0xff] %vm558, %v613
      %642 = vst.msk [vmem:[%s313 + $0x10] sm:$0xff] %vm558, %v618
      %643 = vst.msk [vmem:[%s313 + $0x18] sm:$0xff] %vm558, %v621
      %644 = vst.msk [vmem:[%s313 + $0x20] sm:$0xff] %vm558, %v626
      %645 = vst.msk [vmem:[%s313 + $0x28] sm:$0xff] %vm558, %v629
      %646 = vst.msk [vmem:[%s313 + $0x30] sm:$0xff] %vm558, %v634
      %647 = vst.msk [vmem:[%s313 + $0x38] sm:$0xff] %vm558, %v637
      %s648 = smul.u32 8, %s23
      %p649 = scmp.lt.s32.totalorder %s22, 1
      %s650 = scalar_select %p649, %s22, 1
      %p651 = scmp.lt.s32.totalorder %s648, 7
      %s652 = scalar_select %p651, %s648, 7
      %s653 = smul.addr %s650, 8
      %s654 = sadd.s32 %s652, %s653
      %s655 = smul.addr %s654, 4
      %s656 = scalar_lea.vmem %s5, %s655
      %s657 = smul.u32 8, %s23
      %p658 = scmp.lt.s32.totalorder %s22, 1
      %s659 = scalar_select %p658, %s22, 1
      %p660 = scmp.lt.s32.totalorder %s657, 7
      %s661 = scalar_select %p660, %s657, 7
      %s662 = smul.addr %s659, 8
      %s663 = sadd.s32 %s661, %s662
      %s664 = smul.addr %s663, 8
      %s665 = scalar_lea.vmem %s6, %s664
      // Predicated region
      $region41: #{yolox_forward.3} parent=39 // pred_check
        %p666 = pneg %p162
      $region42: #{yolox_forward.3} parent=39 // pred_check_branch
        %668 = sbr.rel (%p666) target = $region44
      $region43: #{yolox_forward.3} parent=39 // pred_region
        %s669 = smul.u32 8, %s23
      $region44: #{yolox_forward.3} parent=39 // pred_fallthru
        _
      // Predicated region
      $region45: #{yolox_forward.3} parent=39 // pred_check
        %p670 = pneg %p190
      $region46: #{yolox_forward.3} parent=39 // pred_check_branch
        %672 = sbr.rel (%p670) target = $region48
      $region47: #{yolox_forward.3} parent=39 // pred_region
        %s673 = smul.u32 8, %s23
      $region48: #{yolox_forward.3} parent=39 // pred_fallthru
        _
    $region40: #{yolox_forward.3} parent=5 // pred_fallthru
      _
    %p674 = scmp.le.s32.totalorder 2, %s13
    // Predicated region
    $region49: #{yolox_forward.3} parent=5 // pred_check
      %p675 = pneg %p674
    $region50: #{yolox_forward.3} parent=5 // pred_check_branch
      %677 = sbr.rel (%p675) target = $region52
    $region51: #{yolox_forward.3} parent=5 // pred_region
      %s678 = ssub.s32 %s13, 2
      // Predicated region
      $region53: #{yolox_forward.3} parent=51 // pred_check
        %p679 = pneg %p168
      $region54: #{yolox_forward.3} parent=51 // pred_check_branch
        %681 = sbr.rel (%p679) target = $region56
      $region55: #{yolox_forward.3} parent=51 // pred_region
        %s682 = smul.u32 8, %s25
        %p683 = scmp.lt.s32.totalorder %s24, 1
        %s684 = scalar_select %p683, %s24, 1
        %p685 = scmp.lt.s32.totalorder %s682, 7
        %s686 = scalar_select %p685, %s682, 7
        %s687 = smul.addr %s684, 8
        %s688 = sadd.s32 %s686, %s687
        %s689 = smul.addr %s688, 4
        %s690 = scalar_lea.vmem %s5, %s689
      $region56: #{yolox_forward.3} parent=51 // pred_fallthru
        _
      // Predicated region
      $region57: #{yolox_forward.3} parent=51 // pred_check
        %p691 = pneg %p196
      $region58: #{yolox_forward.3} parent=51 // pred_check_branch
        %693 = sbr.rel (%p691) target = $region60
      $region59: #{yolox_forward.3} parent=51 // pred_region
        %s694 = smul.u32 8, %s25
        %p695 = scmp.lt.s32.totalorder %s24, 1
        %s696 = scalar_select %p695, %s24, 1
        %p697 = scmp.lt.s32.totalorder %s694, 7
        %s698 = scalar_select %p697, %s694, 7
        %s699 = smul.addr %s696, 8
        %s700 = sadd.s32 %s698, %s699
        %s701 = smul.addr %s700, 8
        %s702 = scalar_lea.vmem %s6, %s701
      $region60: #{yolox_forward.3} parent=51 // pred_fallthru
        _
    $region52: #{yolox_forward.3} parent=5 // pred_fallthru
      _
  $region6: #{yolox_forward.3} parent=0 // loop_footer
    %s17 = sadd.s32 1, %s13
  $region7: #{yolox_forward.3} parent=0 // loop_footer_branch
    %12 = sbr.rel target = $region3
  $region8: #{yolox_forward.3} parent=0 // loop_exit
    _

// kernel: yolox_forward.4
$region0: #{yolox_forward.4}
  #allocation0 [shape = 'u32[]', space=smem, size = 0x4, offset = 0x4, fixed_abs, tag = 'smem constant byte address 0x4 - core index']
  #allocation1 [shape = 'u32[144,128]{1,0:T(1,128)}', space=vmem, size = 0x12000, scoped, tag = 'internal scratch']
  %s0 = inlined_call_operand.vmem [shape: bf16[2,16,80], index: 0, kind: input, shape index: {}]
  %s1 = inlined_call_operand.vmem [shape: bf16[80,16], index: 1, kind: input, shape index: {}]
  %s2 = inlined_call_operand.vmem [shape: f32[1,16], index: 2, kind: input, shape index: {}]
  %s3 = inlined_call_operand.vmem [shape: bf16[16,8], index: 3, kind: input, shape index: {}]
  %s4 = inlined_call_operand.vmem [shape: f32[1,8], index: 4, kind: input, shape index: {}]
  %s5 = inlined_call_operand.vmem [shape: bf16[2,16,16], index: 5, kind: output, shape index: {0}]
  %s6 = inlined_call_operand.vmem [shape: f32[2,16,8], index: 6, kind: output, shape index: {1}]
  %7 = xla_tuple %s5, %s6
  %s8 = sld [smem:[#allocation0]]
  $region61: #{yolox_forward.4} parent=0
    _
  %s10 = ssub.s32 1, %s8
  %s11 = scalar_select 0, %s10, %s8
  loop: start=0, step=1, limit=4
  $region2: #{yolox_forward.4} parent=0 // loop_pre_header
    _
  $region3: #{yolox_forward.4} parent=0 // loop_header
    %s13 = sphi 0, %s17
    %p14 = scmp.ge.s32.totalorder %s13, 4
    %s20 = sphi 0, %s32
    %s21 = sphi 0, %s28
    %s22 = sphi 0, %s20
    %s23 = sphi 0, %s21
    %s24 = sphi 0, %s22
    %s25 = sphi 0, %s23
    %s37 = sphi 0, %s39
    %s40 = sphi 0, %s37
    %s41 = sphi 0, %s40
    %s57 = sphi 0, %s41
    %s61 = sphi 0, %s61
    %s63 = sphi 0, %s61
    %s64 = sphi 0, %s63
    %s78 = sphi 0, %s64
    %s82 = sphi 0, %s82
    %s84 = sphi 0, %s82
    %s85 = sphi 0, %s84
    %s99 = sphi 0, %s85
    %s103 = sphi 0, %s103
    %s105 = sphi 0, %s103
    %s106 = sphi 0, %s105
    %s120 = sphi 0, %s106
    %s124 = sphi 0, %s124
    %s126 = sphi 0, %s124
    %s127 = sphi 0, %s126
    %s141 = sphi 0, %s127
    %s149 = sphi 0, %s151
    %s152 = sphi 0, %s149
    %s153 = sphi 0, %s152
    %s169 = sphi 0, %s153
    %s177 = sphi 0, %s179
    %s180 = sphi 0, %s177
    %s181 = sphi 0, %s180
    %s197 = sphi 0, %s181
  $region4: #{yolox_forward.4} parent=0 // loop_header_branch
    %16 = sbr.rel (%p14) target = $region8
  $region5: #{yolox_forward.4} parent=0 // loop_body
    %s18 = ssub.s32 %s13, 1
    %s19 = ssub.s32 %s13, 2
    %s26 = sadd.s32 1, %s21
    %p27 = scmp.ge.s32.totalorder %s26, 1
    %s28 = scalar_select %p27, 0, %s26
    %s29 = sadd.s32 1, %s20
    %s30 = scalar_select %p27, %s29, %s20
    %p31 = scmp.ge.s32.totalorder %s30, 2
    %s32 = scalar_select %p31, 0, %s30
    %s33 = ssub.s32 %s20, %s32
    %s34 = ssub.s32 %s21, %s28
    %s35 = sor.u32 %s33, %s34
    %p36 = scmp.eq.s32.totalorder %s35, 0
    %s38 = sadd.s32 %s37, 1
    %s39 = scalar_select %p36, %s37, %s38
    %p42 = pneg %p36
    %p43 = scmp.eq.s32.totalorder %s13, 1
    %p44 = por %p42, %p43
    %p45 = scmp.ne.s32.totalorder %s37, %s40
    %p46 = scmp.eq.s32.totalorder %s13, 0
    %p47 = por %p45, %p46
    %p48 = scmp.ne.s32.totalorder %s37, %s40
    %p49 = scmp.eq.s32.totalorder %s18, 1
    %p50 = por %p48, %p49
    %p51 = scmp.ne.s32.totalorder %s40, %s41
    %p52 = scmp.eq.s32.totalorder %s18, 0
    %p53 = por %p51, %p52
    %p54 = scmp.ne.s32.totalorder %s40, %s41
    %p55 = scmp.eq.s32.totalorder %s19, 1
    %p56 = por %p54, %p55
    %p58 = scmp.ne.s32.totalorder %s41, %s57
    %p59 = scmp.eq.s32.totalorder %s19, 0
    %p60 = por %p58, %p59
    %s62 = sadd.s32 %s61, 1
    %p65 = scmp.eq.s32.totalorder %s13, 1
    %p66 = scmp.ne.s32.totalorder %s61, %s63
    %p67 = scmp.eq.s32.totalorder %s13, 0
    %p68 = por %p66, %p67
    %p69 = scmp.ne.s32.totalorder %s61, %s63
    %p70 = scmp.eq.s32.totalorder %s18, 1
    %p71 = por %p69, %p70
    %p72 = scmp.ne.s32.totalorder %s63, %s64
    %p73 = scmp.eq.s32.totalorder %s18, 0
    %p74 = por %p72, %p73
    %p75 = scmp.ne.s32.totalorder %s63, %s64
    %p76 = scmp.eq.s32.totalorder %s19, 1
    %p77 = por %p75, %p76
    %p79 = scmp.ne.s32.totalorder %s64, %s78
    %p80 = scmp.eq.s32.totalorder %s19, 0
    %p81 = por %p79, %p80
    %s83 = sadd.s32 %s82, 1
    %p86 = scmp.eq.s32.totalorder %s13, 1
    %p87 = scmp.ne.s32.totalorder %s82, %s84
    %p88 = scmp.eq.s32.totalorder %s13, 0
    %p89 = por %p87, %p88
    %p90 = scmp.ne.s32.totalorder %s82, %s84
    %p91 = scmp.eq.s32.totalorder %s18, 1
    %p92 = por %p90, %p91
    %p93 = scmp.ne.s32.totalorder %s84, %s85
    %p94 = scmp.eq.s32.totalorder %s18, 0
    %p95 = por %p93, %p94
    %p96 = scmp.ne.s32.totalorder %s84, %s85
    %p97 = scmp.eq.s32.totalorder %s19, 1
    %p98 = por %p96, %p97
    %p100 = scmp.ne.s32.totalorder %s85, %s99
    %p101 = scmp.eq.s32.totalorder %s19, 0
    %p102 = por %p100, %p101
    %s104 = sadd.s32 %s103, 1
    %p107 = scmp.eq.s32.totalorder %s13, 1
    %p108 = scmp.ne.s32.totalorder %s103, %s105
    %p109 = scmp.eq.s32.totalorder %s13, 0
    %p110 = por %p108, %p109
    %p111 = scmp.ne.s32.totalorder %s103, %s105
    %p112 = scmp.eq.s32.totalorder %s18, 1
    %p113 = por %p111, %p112
    %p114 = scmp.ne.s32.totalorder %s105, %s106
    %p115 = scmp.eq.s32.totalorder %s18, 0
    %p116 = por %p114, %p115
    %p117 = scmp.ne.s32.totalorder %s105, %s106
    %p118 = scmp.eq.s32.totalorder %s19, 1
    %p119 = por %p117, %p118
    %p121 = scmp.ne.s32.totalorder %s106, %s120
    %p122 = scmp.eq.s32.totalorder %s19, 0
    %p123 = por %p121, %p122
    %s125 = sadd.s32 %s124, 1
    %p128 = scmp.eq.s32.totalorder %s13, 1
    %p129 = scmp.ne.s32.totalorder %s124, %s126
    %p130 = scmp.eq.s32.totalorder %s13, 0
    %p131 = por %p129, %p130
    %p132 = scmp.ne.s32.totalorder %s124, %s126
    %p133 = scmp.eq.s32.totalorder %s18, 1
    %p134 = por %p132, %p133
    %p135 = scmp.ne.s32.totalorder %s126, %s127
    %p136 = scmp.eq.s32.totalorder %s18, 0
    %p137 = por %p135, %p136
    %p138 = scmp.ne.s32.totalorder %s126, %s127
    %p139 = scmp.eq.s32.totalorder %s19, 1
    %p140 = por %p138, %p139
    %p142 = scmp.ne.s32.totalorder %s127, %s141
    %p143 = scmp.eq.s32.totalorder %s19, 0
    %p144 = por %p142, %p143
    %s145 = ssub.s32 %s20, %s32
    %s146 = ssub.s32 %s21, %s28
    %s147 = sor.u32 %s145, %s146
    %p148 = scmp.eq.s32.totalorder %s147, 0
    %s150 = sadd.s32 %s149, 1
    %s151 = scalar_select %p148, %s149, %s150
    %p154 = pneg %p148
    %p155 = scmp.eq.s32.totalorder %s13, 1
    %p156 = por %p154, %p155
    %p157 = scmp.ne.s32.totalorder %s149, %s152
    %p158 = scmp.eq.s32.totalorder %s13, 0
    %p159 = por %p157, %p158
    %p160 = scmp.ne.s32.totalorder %s149, %s152
    %p161 = scmp.eq.s32.totalorder %s18, 1
    %p162 = por %p160, %p161
    %p163 = scmp.ne.s32.totalorder %s152, %s153
    %p164 = scmp.eq.s32.totalorder %s18, 0
    %p165 = por %p163, %p164
    %p166 = scmp.ne.s32.totalorder %s152, %s153
    %p167 = scmp.eq.s32.totalorder %s19, 1
    %p168 = por %p166, %p167
    %p170 = scmp.ne.s32.totalorder %s153, %s169
    %p171 = scmp.eq.s32.totalorder %s19, 0
    %p172 = por %p170, %p171
    %s173 = ssub.s32 %s20, %s32
    %s174 = ssub.s32 %s21, %s28
    %s175 = sor.u32 %s173, %s174
    %p176 = scmp.eq.s32.totalorder %s175, 0
    %s178 = sadd.s32 %s177, 1
    %s179 = scalar_select %p176, %s177, %s178
    %p182 = pneg %p176
    %p183 = scmp.eq.s32.totalorder %s13, 1
    %p184 = por %p182, %p183
    %p185 = scmp.ne.s32.totalorder %s177, %s180
    %p186 = scmp.eq.s32.totalorder %s13, 0
    %p187 = por %p185, %p186
    %p188 = scmp.ne.s32.totalorder %s177, %s180
    %p189 = scmp.eq.s32.totalorder %s18, 1
    %p190 = por %p188, %p189
    %p191 = scmp.ne.s32.totalorder %s180, %s181
    %p192 = scmp.eq.s32.totalorder %s18, 0
    %p193 = por %p191, %p192
    %p194 = scmp.ne.s32.totalorder %s180, %s181
    %p195 = scmp.eq.s32.totalorder %s19, 1
    %p196 = por %p194, %p195
    %p198 = scmp.ne.s32.totalorder %s181, %s197
    %p199 = scmp.eq.s32.totalorder %s19, 0
    %p200 = por %p198, %p199
    %p201 = scmp.le.s32.totalorder 1, %s13
    %p202 = scmp.lt.s32.totalorder %s13, 3
    %p203 = pnand %p201, %p202
    %p204 = pneg %p203
    // Predicated region
    $region9: #{yolox_forward.4} parent=5 // pred_check
      _
    $region10: #{yolox_forward.4} parent=5 // pred_check_branch
      %206 = sbr.rel (%p203) target = $region12
    $region11: #{yolox_forward.4} parent=5 // pred_region
      %s207 = ssub.s32 %s13, 1
      // Predicated region
      $region13: #{yolox_forward.4} parent=11 // pred_check
        %p208 = pneg %p74
      $region14: #{yolox_forward.4} parent=11 // pred_check_branch
        %210 = sbr.rel (%p208) target = $region16
      $region15: #{yolox_forward.4} parent=11 // pred_region
        _
      $region16: #{yolox_forward.4} parent=11 // pred_fallthru
        _
      // Predicated region
      $region17: #{yolox_forward.4} parent=11 // pred_check
        %p211 = pneg %p95
      $region18: #{yolox_forward.4} parent=11 // pred_check_branch
        %213 = sbr.rel (%p211) target = $region20
      $region19: #{yolox_forward.4} parent=11 // pred_region
        _
      $region20: #{yolox_forward.4} parent=11 // pred_fallthru
        _
      // Predicated region
      $region21: #{yolox_forward.4} parent=11 // pred_check
        %p214 = pneg %p116
      $region22: #{yolox_forward.4} parent=11 // pred_check_branch
        %216 = sbr.rel (%p214) target = $region24
      $region23: #{yolox_forward.4} parent=11 // pred_region
        _
      $region24: #{yolox_forward.4} parent=11 // pred_fallthru
        _
      // Predicated region
      $region25: #{yolox_forward.4} parent=11 // pred_check
        %p217 = pneg %p137
      $region26: #{yolox_forward.4} parent=11 // pred_check_branch
        %219 = sbr.rel (%p217) target = $region28
      $region27: #{yolox_forward.4} parent=11 // pred_region
        _
      $region28: #{yolox_forward.4} parent=11 // pred_fallthru
        _
    $region12: #{yolox_forward.4} parent=5 // pred_fallthru
      _
    %p220 = scmp.lt.s32.totalorder %s13, 2
    // Predicated region
    $region29: #{yolox_forward.4} parent=5 // pred_check
      %p221 = pneg %p220
    $region30: #{yolox_forward.4} parent=5 // pred_check_branch
      %223 = sbr.rel (%p221) target = $region32
    $region31: #{yolox_forward.4} parent=5 // pred_region
      // Predicated region
      $region33: #{yolox_forward.4} parent=31 // pred_check
        %p224 = pneg %p47
      $region34: #{yolox_forward.4} parent=31 // pred_check_branch
        %226 = sbr.rel (%p224) target = $region36
      $region35: #{yolox_forward.4} parent=31 // pred_region
        %s227 = smul.u32 2, %s21
        %p228 = scmp.lt.s32.totalorder %s20, 1
        %s229 = scalar_select %p228, %s20, 1
        %p230 = scmp.lt.s32.totalorder %s227, 1
        %s231 = scalar_select %p230, %s227, 1
        %s232 = smul.addr %s229, 2
        %s233 = sadd.s32 %s231, %s232
        %s234 = smul.addr %s233, 4
        %s235 = scalar_lea.vmem %s0, %s234
        %s236 = smul.u32 2, %s21
      $region36: #{yolox_forward.4} parent=31 // pred_fallthru
        _
    $region32: #{yolox_forward.4} parent=5 // pred_fallthru
      _
    %p237 = scmp.le.s32.totalorder 1, %s13
    %p238 = scmp.lt.s32.totalorder %s13, 3
    %p239 = pnand %p237, %p238
    %p240 = pneg %p239
    // Predicated region
    $region37: #{yolox_forward.4} parent=5 // pred_check
      _
    $region38: #{yolox_forward.4} parent=5 // pred_check_branch
      %242 = sbr.rel (%p239) target = $region40
    $region39: #{yolox_forward.4} parent=5 // pred_region
      %s243 = ssub.s32 %s13, 1
      %s244 = smul.u32 2, %s23
      %p245 = scmp.lt.s32.totalorder %s22, 1
      %s246 = scalar_select %p245, %s22, 1
      %p247 = scmp.lt.s32.totalorder %s244, 1
      %s248 = scalar_select %p247, %s244, 1
      %s249 = smul.addr %s246, 2
      %s250 = sadd.s32 %s248, %s249
      %s251 = smul.addr %s250, 4
      %s252 = scalar_lea.vmem %s0, %s251
      %p253 = pneg %p53
      %p254 = pneg %p50
      %p255 = pneg %p74
      %p256 = pneg %p71
      %p257 = pneg %p95
      %p258 = pneg %p92
      %p259 = pneg %p116
      %p260 = pneg %p113
      %p261 = pneg %p137
      %p262 = pneg %p134
      %p263 = pneg %p165
      %p264 = pneg %p162
      %s265 = smul.u32 2, %s23
      %p266 = scmp.lt.s32.totalorder %s22, 1
      %s267 = scalar_select %p266, %s22, 1
      %p268 = scmp.lt.s32.totalorder %s265, 1
      %s269 = scalar_select %p268, %s265, 1
      %s270 = smul.addr %s267, 2
      %s271 = sadd.s32 %s269, %s270
      %s272 = smul.addr %s271, 4
      %s273 = scalar_lea.vmem %s5, %s272
      %p274 = pneg %p193
      %p275 = pneg %p190
      %s276 = smul.u32 2, %s23
      %p277 = scmp.lt.s32.totalorder %s22, 1
      %s278 = scalar_select %p277, %s22, 1
      %p279 = scmp.lt.s32.totalorder %s276, 1
      %s280 = scalar_select %p279, %s276, 1
      %s281 = smul.addr %s278, 2
      %s282 = sadd.s32 %s280, %s281
      %s283 = smul.addr %s282, 8
      %s284 = scalar_lea.vmem %s6, %s283
      %s285 = smul.u32 2, %s23
      %p286 = scmp.lt.s32.totalorder %s22, 1
      %s287 = scalar_select %p286, %s22, 1
      %p288 = scmp.lt.s32.totalorder %s285, 1
      %s289 = scalar_select %p288, %s285, 1
      %s290 = smul.addr %s287, 2
      %s291 = sadd.s32 %s289, %s290
      %s292 = smul.addr %s291, 4
      %s293 = scalar_lea.vmem %s0, %s292
      %s294 = smul.u32 2, %s23
      %s295 = smul.u32 2, %s23
      %p296 = scmp.lt.s32.totalorder %s22, 1
      %s297 = scalar_select %p296, %s22, 1
      %p298 = scmp.lt.s32.totalorder %s295, 1
      %s299 = scalar_select %p298, %s295, 1
      %s300 = smul.addr %s297, 2
      %s301 = sadd.s32 %s299, %s300
      %s302 = smul.addr %s301, 4
      %s303 = scalar_lea.vmem %s5, %s302
      %s304 = smul.u32 2, %s23
      %s305 = smul.u32 2, %s23
      %p306 = scmp.lt.s32.totalorder %s22, 1
      %s307 = scalar_select %p306, %s22, 1
      %p308 = scmp.lt.s32.totalorder %s305, 1
      %s309 = scalar_select %p308, %s305, 1
      %s310 = smul.addr %s307, 2
      %s311 = sadd.s32 %s309, %s310
      %s312 = smul.addr %s311, 8
      %s313 = scalar_lea.vmem %s6, %s312
      %s314 = smul.u32 2, %s23
      %v316 = vld [vmem:[%s293] sm:$0xf]
      %v317 = vld [vmem:[%s293 + $0x4] sm:$0xf]
      %v318 = vld [vmem:[%s1] sm:$0xf]
      %v319 = vld [vmem:[%s1 + $0x4] sm:$0xf]
      %v320 = vld [vmem:[%s1 + $0x8] sm:$0xf]
      %v321 = vld [vmem:[%s1 + $0xc] sm:$0xf]
      %v322 = vld [vmem:[%s1 + $0x10] sm:$0xf]
      %v323 = vld [vmem:[%s1 + $0x14] sm:$0xf]
      %v324 = vld [vmem:[%s1 + $0x18] sm:$0xf]
      %v325 = vld [vmem:[%s1 + $0x1c] sm:$0xf]
      %v326 = vld [vmem:[%s1 + $0x20] sm:$0xf]
      %v327 = vld [vmem:[%s1 + $0x24] sm:$0xf]
      %v328 = vld [vmem:[%s2] sm:$0x1]
      %v330 = vlaneseq
      %v331 = vshrl.u32 %v330, 7
      %v332 = vsub.s32 0, %v331
      %v333 = vrot.slane %v328, %v332
      %v337 = vunpack.c.l.b16 %v316
      %v338 = vunpack.c.l.b16 %v317
      %v339 = vpack.c.b16 %v338, %v337
      %v350 = vunpack.c.l.b16 %v318
      %v351 = vunpack.c.l.b16 %v319
      %v352 = vunpack.c.l.b16 %v320
      %v353 = vunpack.c.l.b16 %v321
      %v354 = vunpack.c.l.b16 %v322
      %v355 = vunpack.c.l.b16 %v323
      %v356 = vunpack.c.l.b16 %v324
      %v357 = vunpack.c.l.b16 %v325
      %v358 = vunpack.c.l.b16 %v326
      %v359 = vunpack.c.l.b16 %v327
      %v360 = vpack.c.b16 %v351, %v350
      %v361 = vpack.c.b16 %v353, %v352
      %v362 = vpack.c.b16 %v355, %v354
      %v363 = vpack.c.b16 %v357, %v356
      %v364 = vpack.c.b16 %v359, %v358
      %vm370 = vcmask 654336
      %v372 = vsel %vm370, %v339, 0
      %374 = vmatprep.subr.bf16.mxu0 0
      %375 = vmatpush1.bf16.msra.mxu0 %v360
      %376 = vmatprep.subr.bf16.mxu0 0
      %377 = vmatpush1.bf16.msra.mxu0 %v361
      %378 = vmatprep.subr.bf16.mxu0 0
      %379 = vmatpush1.bf16.msra.mxu0 %v362
      %380 = vmatprep.subr.bf16.mxu0 0
      %381 = vmatpush1.bf16.msra.mxu0 %v363
      %382 = vmatprep.subr.bf16.mxu0 0
      %383 = vmatpush1.bf16.msra.mxu0 %v364
      %384 = vmatprep.subr.bf16.mxu0 0
      %385 = vmatpush1.bf16.msra.mxu0 0
      %386 = vmatprep.subr.bf16.mxu0 0
      %387 = vmatpush1.bf16.msra.mxu0 0
      %388 = vmatprep.subr.bf16.mxu0 0
      %389 = vmatpush1.bf16.msra.mxu0 0
      %390 = vmatprep.subr.bf16.mxu0 0
      %391 = vmatpush1.bf16.msra.mxu0 0
      %392 = vmatprep.subr.bf16.mxu0 0
      %393 = vmatpush1.bf16.msra.mxu0 0
      %394 = vmatprep.subr.bf16.mxu0 0
      %395 = vmatpush1.bf16.msra.mxu0 0
      %396 = vmatprep.subr.bf16.mxu0 0
      %397 = vmatpush1.bf16.msra.mxu0 0
      %398 = vmatprep.subr.bf16.mxu0 0
      %399 = vmatpush1.bf16.msra.mxu0 0
      %400 = vmatprep.subr.bf16.mxu0 0
      %401 = vmatpush1.bf16.msra.mxu0 0
      %402 = vmatprep.subr.bf16.mxu0 0
      %403 = vmatpush1.bf16.msra.mxu0 0
      %404 = vmatprep.subr.bf16.mxu0 0
      %405 = vmatpush1.bf16.msra.mxu0 0
      %406 = vmatprep.mubr.bf16.mxu0 0
      %407 = vmatmul.mubr.bf16.gmra.mrb[0].mxu0 %v372
      %v408 = vpop.f32.mrb[0].mxu0
      %v409 = vadd.f32 %v333, %v408
      %v410 = vpop.f32.mrb[0].mxu0
      %v411 = vpop.f32.mrb[0].mxu0
      %v412 = vadd.f32 %v333, %v411
      %v413 = vpop.f32.mrb[0].mxu0
      %414 = vdwg.mxu0
      %v415 = vxor.u32 %v409, 2147483648
      %v416 = vxor.u32 %v412, 2147483648
      %v417 = vmul.f32 %v415, 1.442695
      %v418 = vpow.pop %v417
      %v419 = vmul.f32 %v416, 1.442695
      %v420 = vpow.pop %v419
      %v421 = vadd.f32 %v418, 1.0
      %v422 = vadd.f32 %v420, 1.0
      %v423 = vrcp.pop %v421
      %v424 = vmul.f32 1.0, %v423
      %v425 = vrcp.pop %v422
      %v426 = vmul.f32 1.0, %v425
      %v427 = vmul.f32 %v409, %v424
      %v428 = vmul.f32 %v412, %v426
      %v429 = vpack.c.bf16 %v428, %v427
      %v431 = vunpack.c.l.b16 %v429
      %v432 = vunpack.c.h.b16 %v429
      %v433 = vpack.c.b16 %v431, %v431
      %v434 = vpack.c.b16 %v432, %v432
      %vm437 = vcmask 125952
      %438 = vst.msk [vmem:[%s303] sm:$0xf] %vm437, %v433
      %439 = vst.msk [vmem:[%s303 + $0x4] sm:$0xf] %vm437, %v434
      %v440 = vld [vmem:[%s3] sm:$0xf]
      %v441 = vld [vmem:[%s3 + $0x4] sm:$0xf]
      %v442 = vld [vmem:[%s4] sm:$0x1]
      %v444 = vlaneseq
      %v445 = vshrl.u32 %v444, 7
      %v446 = vsub.s32 0, %v445
      %v447 = vrot.slane %v442, %v446
      %v451 = vunpack.c.l.b16 %v440
      %v452 = vunpack.c.l.b16 %v441
      %v453 = vpack.c.b16 %v452, %v451
      %vm455 = vcmask 130048
      %v457 = vsel %vm455, %v429, 0
      %459 = vmatprep.subr.bf16.mxu0 0
      %460 = vmatpush1.bf16.msra.mxu0 %v453
      %461 = vmatprep.subr.bf16.mxu0 0
      %462 = vmatpush1.bf16.msra.mxu0 0
      %463 = vmatprep.subr.bf16.mxu0 0
      %464 = vmatpush1.bf16.msra.mxu0 0
      %465 = vmatprep.subr.bf16.mxu0 0
      %466 = vmatpush1.bf16.msra.mxu0 0
      %467 = vmatprep.subr.bf16.mxu0 0
      %468 = vmatpush1.bf16.msra.mxu0 0
      %469 = vmatprep.subr.bf16.mxu0 0
      %470 = vmatpush1.bf16.msra.mxu0 0
      %471 = vmatprep.subr.bf16.mxu0 0
      %472 = vmatpush1.bf16.msra.mxu0 0
      %473 = vmatprep.subr.bf16.mxu0 0
      %474 = vmatpush1.bf16.msra.mxu0 0
      %475 = vmatprep.subr.bf16.mxu0 0
      %476 = vmatpush1.bf16.msra.mxu0 0
      %477 = vmatprep.subr.bf16.mxu0 0
      %478 = vmatpush1.bf16.msra.mxu0 0
      %479 = vmatprep.subr.bf16.mxu0 0
      %480 = vmatpush1.bf16.msra.mxu0 0
      %481 = vmatprep.subr.bf16.mxu0 0
      %482 = vmatpush1.bf16.msra.mxu0 0
      %483 = vmatprep.subr.bf16.mxu0 0
      %484 = vmatpush1.bf16.msra.mxu0 0
      %485 = vmatprep.subr.bf16.mxu0 0
      %486 = vmatpush1.bf16.msra.mxu0 0
      %487 = vmatprep.subr.bf16.mxu0 0
      %488 = vmatpush1.bf16.msra.mxu0 0
      %489 = vmatprep.subr.bf16.mxu0 0
      %490 = vmatpush1.bf16.msra.mxu0 0
      %491 = vmatprep.mubr.bf16.mxu0 0
      %492 = vmatmul.mubr.bf16.gmra.mrb[0].mxu0 %v457
      %v493 = vpop.f32.mrb[0].mxu0
      %v494 = vadd.f32 %v447, %v493
      %v495 = vpop.f32.mrb[0].mxu0
      %v496 = vpop.f32.mrb[0].mxu0
      %v497 = vadd.f32 %v447, %v496
      %v498 = vpop.f32.mrb[0].mxu0
      %499 = vdwg.mxu0
      %vm500 = vcmask 64512
      %501 = vst.msk [vmem:[%s313] sm:$0xff] %vm500, %v494
      %502 = vst.msk [vmem:[%s313 + $0x8] sm:$0xff] %vm500, %v497
      %s503 = smul.u32 2, %s23
      %p504 = scmp.lt.s32.totalorder %s22, 1
      %s505 = scalar_select %p504, %s22, 1
      %p506 = scmp.lt.s32.totalorder %s503, 1
      %s507 = scalar_select %p506, %s503, 1
      %s508 = smul.addr %s505, 2
      %s509 = sadd.s32 %s507, %s508
      %s510 = smul.addr %s509, 4
      %s511 = scalar_lea.vmem %s5, %s510
      %s512 = smul.u32 2, %s23
      %p513 = scmp.lt.s32.totalorder %s22, 1
      %s514 = scalar_select %p513, %s22, 1
      %p515 = scmp.lt.s32.totalorder %s512, 1
      %s516 = scalar_select %p515, %s512, 1
      %s517 = smul.addr %s514, 2
      %s518 = sadd.s32 %s516, %s517
      %s519 = smul.addr %s518, 8
      %s520 = scalar_lea.vmem %s6, %s519
      // Predicated region
      $region41: #{yolox_forward.4} parent=39 // pred_check
        %p521 = pneg %p162
      $region42: #{yolox_forward.4} parent=39 // pred_check_branch
        %523 = sbr.rel (%p521) target = $region44
      $region43: #{yolox_forward.4} parent=39 // pred_region
        %s524 = smul.u32 2, %s23
      $region44: #{yolox_forward.4} parent=39 // pred_fallthru
        _
      // Predicated region
      $region45: #{yolox_forward.4} parent=39 // pred_check
        %p525 = pneg %p190
      $region46: #{yolox_forward.4} parent=39 // pred_check_branch
        %527 = sbr.rel (%p525) target = $region48
      $region47: #{yolox_forward.4} parent=39 // pred_region
        %s528 = smul.u32 2, %s23
      $region48: #{yolox_forward.4} parent=39 // pred_fallthru
        _
    $region40: #{yolox_forward.4} parent=5 // pred_fallthru
      _
    %p529 = scmp.le.s32.totalorder 2, %s13
    // Predicated region
    $region49: #{yolox_forward.4} parent=5 // pred_check
      %p530 = pneg %p529
    $region50: #{yolox_forward.4} parent=5 // pred_check_branch
      %532 = sbr.rel (%p530) target = $region52
    $region51: #{yolox_forward.4} parent=5 // pred_region
      %s533 = ssub.s32 %s13, 2
      // Predicated region
      $region53: #{yolox_forward.4} parent=51 // pred_check
        %p534 = pneg %p168
      $region54: #{yolox_forward.4} parent=51 // pred_check_branch
        %536 = sbr.rel (%p534) target = $region56
      $region55: #{yolox_forward.4} parent=51 // pred_region
        %s537 = smul.u32 2, %s25
        %p538 = scmp.lt.s32.totalorder %s24, 1
        %s539 = scalar_select %p538, %s24, 1
        %p540 = scmp.lt.s32.totalorder %s537, 1
        %s541 = scalar_select %p540, %s537, 1
        %s542 = smul.addr %s539, 2
        %s543 = sadd.s32 %s541, %s542
        %s544 = smul.addr %s543, 4
        %s545 = scalar_lea.vmem %s5, %s544
      $region56: #{yolox_forward.4} parent=51 // pred_fallthru
        _
      // Predicated region
      $region57: #{yolox_forward.4} parent=51 // pred_check
        %p546 = pneg %p196
      $region58: #{yolox_forward.4} parent=51 // pred_check_branch
        %548 = sbr.rel (%p546) target = $region60
      $region59: #{yolox_forward.4} parent=51 // pred_region
        %s549 = smul.u32 2, %s25
        %p550 = scmp.lt.s32.totalorder %s24, 1
        %s551 = scalar_select %p550, %s24, 1
        %p552 = scmp.lt.s32.totalorder %s549, 1
        %s553 = scalar_select %p552, %s549, 1
        %s554 = smul.addr %s551, 2
        %s555 = sadd.s32 %s553, %s554
        %s556 = smul.addr %s555, 8
        %s557 = scalar_lea.vmem %s6, %s556
      $region60: #{yolox_forward.4} parent=51 // pred_fallthru
        _
    $region52: #{yolox_forward.4} parent=5 // pred_fallthru
      _
  $region6: #{yolox_forward.4} parent=0 // loop_footer
    %s17 = sadd.s32 1, %s13
  $region7: #{yolox_forward.4} parent=0 // loop_footer_branch
    %12 = sbr.rel target = $region3
  $region8: #{yolox_forward.4} parent=0 // loop_exit
    _

// kernel: yolox_forward.5
$region0: #{yolox_forward.5}
  #allocation0 [shape = 'u32[]', space=smem, size = 0x4, offset = 0x4, fixed_abs, tag = 'smem constant byte address 0x4 - core index']
  #allocation1 [shape = 'u32[144,128]{1,0:T(1,128)}', space=vmem, size = 0x12000, scoped, tag = 'internal scratch']
  %s0 = inlined_call_operand.vmem [shape: bf16[2,16,144], index: 0, kind: input, shape index: {}]
  %s1 = inlined_call_operand.vmem [shape: bf16[144,32], index: 1, kind: input, shape index: {}]
  %s2 = inlined_call_operand.vmem [shape: f32[1,32], index: 2, kind: input, shape index: {}]
  %s3 = inlined_call_operand.vmem [shape: bf16[32,8], index: 3, kind: input, shape index: {}]
  %s4 = inlined_call_operand.vmem [shape: f32[1,8], index: 4, kind: input, shape index: {}]
  %s5 = inlined_call_operand.hbm [shape: bf16[2,16,32], index: 5, kind: output, shape index: {0}]
  %s6 = inlined_call_operand.vmem [shape: f32[2,16,8], index: 6, kind: output, shape index: {1}]
  %7 = xla_tuple %s5, %s6
  %s8 = sld [smem:[#allocation0]]
  $region61: #{yolox_forward.5} parent=0
    _
  %s10 = ssub.s32 1, %s8
  %s11 = scalar_select 0, %s10, %s8
  $region1: #{yolox_forward.5} parent=0
    #allocation2 [shape = 'u8[8192]{0}', space=vmem, size = 0x2000, scoped, tag = 'output window, operand 0']
    #allocation3 [shape = 's32[2]{0}', space=sflag, size = 0x8, scoped, tag = 'scoped memory for yolox_forward.5']
    %12 = vsyncpa [#allocation3], 0
    %s13 = scalar_lea.sflag [#allocation3], 1
    %14 = vsyncpa %s13, 0
    loop: start=0, step=1, limit=4
    $region2: #{yolox_forward.5} parent=1 // loop_pre_header
      _
    $region3: #{yolox_forward.5} parent=1 // loop_header
      %s16 = sphi 0, %s20
      %p17 = scmp.ge.s32.totalorder %s16, 4
      %s23 = sphi 0, %s35
      %s24 = sphi 0, %s31
      %s25 = sphi 0, %s23
      %s26 = sphi 0, %s24
      %s27 = sphi 0, %s25
      %s28 = sphi 0, %s26
      %s40 = sphi 0, %s42
      %s43 = sphi 0, %s40
      %s44 = sphi 0, %s43
      %s60 = sphi 0, %s44
      %s64 = sphi 0, %s64
      %s66 = sphi 0, %s64
      %s67 = sphi 0, %s66
      %s81 = sphi 0, %s67
      %s85 = sphi 0, %s85
      %s87 = sphi 0, %s85
      %s88 = sphi 0, %s87
      %s102 = sphi 0, %s88
      %s106 = sphi 0, %s106
      %s108 = sphi 0, %s106
      %s109 = sphi 0, %s108
      %s123 = sphi 0, %s109
      %s127 = sphi 0, %s127
      %s129 = sphi 0, %s127
      %s130 = sphi 0, %s129
      %s144 = sphi 0, %s130
      %s152 = sphi 0, %s154
      %s155 = sphi 0, %s152
      %s156 = sphi 0, %s155
      %s172 = sphi 0, %s156
      %s180 = sphi 0, %s182
      %s183 = sphi 0, %s180
      %s184 = sphi 0, %s183
      %s200 = sphi 0, %s184
    $region4: #{yolox_forward.5} parent=1 // loop_header_branch
      %19 = sbr.rel (%p17) target = $region8
    $region5: #{yolox_forward.5} parent=1 // loop_body
      %s21 = ssub.s32 %s16, 1
      %s22 = ssub.s32 %s16, 2
      %s29 = sadd.s32 1, %s24
      %p30 = scmp.ge.s32.totalorder %s29, 1
      %s31 = scalar_select %p30, 0, %s29
      %s32 = sadd.s32 1, %s23
      %s33 = scalar_select %p30, %s32, %s23
      %p34 = scmp.ge.s32.totalorder %s33, 2
      %s35 = scalar_select %p34, 0, %s33
      %s36 = ssub.s32 %s23, %s35
      %s37 = ssub.s32 %s24, %s31
      %s38 = sor.u32 %s36, %s37
      %p39 = scmp.eq.s32.totalorder %s38, 0
      %s41 = sadd.s32 %s40, 1
      %s42 = scalar_select %p39, %s40, %s41
      %p45 = pneg %p39
      %p46 = scmp.eq.s32.totalorder %s16, 1
      %p47 = por %p45, %p46
      %p48 = scmp.ne.s32.totalorder %s40, %s43
      %p49 = scmp.eq.s32.totalorder %s16, 0
      %p50 = por %p48, %p49
      %p51 = scmp.ne.s32.totalorder %s40, %s43
      %p52 = scmp.eq.s32.totalorder %s21, 1
      %p53 = por %p51, %p52
      %p54 = scmp.ne.s32.totalorder %s43, %s44
      %p55 = scmp.eq.s32.totalorder %s21, 0
      %p56 = por %p54, %p55
      %p57 = scmp.ne.s32.totalorder %s43, %s44
      %p58 = scmp.eq.s32.totalorder %s22, 1
      %p59 = por %p57, %p58
      %p61 = scmp.ne.s32.totalorder %s44, %s60
      %p62 = scmp.eq.s32.totalorder %s22, 0
      %p63 = por %p61, %p62
      %s65 = sadd.s32 %s64, 1
      %p68 = scmp.eq.s32.totalorder %s16, 1
      %p69 = scmp.ne.s32.totalorder %s64, %s66
      %p70 = scmp.eq.s32.totalorder %s16, 0
      %p71 = por %p69, %p70
      %p72 = scmp.ne.s32.totalorder %s64, %s66
      %p73 = scmp.eq.s32.totalorder %s21, 1
      %p74 = por %p72, %p73
      %p75 = scmp.ne.s32.totalorder %s66, %s67
      %p76 = scmp.eq.s32.totalorder %s21, 0
      %p77 = por %p75, %p76
      %p78 = scmp.ne.s32.totalorder %s66, %s67
      %p79 = scmp.eq.s32.totalorder %s22, 1
      %p80 = por %p78, %p79
      %p82 = scmp.ne.s32.totalorder %s67, %s81
      %p83 = scmp.eq.s32.totalorder %s22, 0
      %p84 = por %p82, %p83
      %s86 = sadd.s32 %s85, 1
      %p89 = scmp.eq.s32.totalorder %s16, 1
      %p90 = scmp.ne.s32.totalorder %s85, %s87
      %p91 = scmp.eq.s32.totalorder %s16, 0
      %p92 = por %p90, %p91
      %p93 = scmp.ne.s32.totalorder %s85, %s87
      %p94 = scmp.eq.s32.totalorder %s21, 1
      %p95 = por %p93, %p94
      %p96 = scmp.ne.s32.totalorder %s87, %s88
      %p97 = scmp.eq.s32.totalorder %s21, 0
      %p98 = por %p96, %p97
      %p99 = scmp.ne.s32.totalorder %s87, %s88
      %p100 = scmp.eq.s32.totalorder %s22, 1
      %p101 = por %p99, %p100
      %p103 = scmp.ne.s32.totalorder %s88, %s102
      %p104 = scmp.eq.s32.totalorder %s22, 0
      %p105 = por %p103, %p104
      %s107 = sadd.s32 %s106, 1
      %p110 = scmp.eq.s32.totalorder %s16, 1
      %p111 = scmp.ne.s32.totalorder %s106, %s108
      %p112 = scmp.eq.s32.totalorder %s16, 0
      %p113 = por %p111, %p112
      %p114 = scmp.ne.s32.totalorder %s106, %s108
      %p115 = scmp.eq.s32.totalorder %s21, 1
      %p116 = por %p114, %p115
      %p117 = scmp.ne.s32.totalorder %s108, %s109
      %p118 = scmp.eq.s32.totalorder %s21, 0
      %p119 = por %p117, %p118
      %p120 = scmp.ne.s32.totalorder %s108, %s109
      %p121 = scmp.eq.s32.totalorder %s22, 1
      %p122 = por %p120, %p121
      %p124 = scmp.ne.s32.totalorder %s109, %s123
      %p125 = scmp.eq.s32.totalorder %s22, 0
      %p126 = por %p124, %p125
      %s128 = sadd.s32 %s127, 1
      %p131 = scmp.eq.s32.totalorder %s16, 1
      %p132 = scmp.ne.s32.totalorder %s127, %s129
      %p133 = scmp.eq.s32.totalorder %s16, 0
      %p134 = por %p132, %p133
      %p135 = scmp.ne.s32.totalorder %s127, %s129
      %p136 = scmp.eq.s32.totalorder %s21, 1
      %p137 = por %p135, %p136
      %p138 = scmp.ne.s32.totalorder %s129, %s130
      %p139 = scmp.eq.s32.totalorder %s21, 0
      %p140 = por %p138, %p139
      %p141 = scmp.ne.s32.totalorder %s129, %s130
      %p142 = scmp.eq.s32.totalorder %s22, 1
      %p143 = por %p141, %p142
      %p145 = scmp.ne.s32.totalorder %s130, %s144
      %p146 = scmp.eq.s32.totalorder %s22, 0
      %p147 = por %p145, %p146
      %s148 = ssub.s32 %s23, %s35
      %s149 = ssub.s32 %s24, %s31
      %s150 = sor.u32 %s148, %s149
      %p151 = scmp.eq.s32.totalorder %s150, 0
      %s153 = sadd.s32 %s152, 1
      %s154 = scalar_select %p151, %s152, %s153
      %p157 = pneg %p151
      %p158 = scmp.eq.s32.totalorder %s16, 1
      %p159 = por %p157, %p158
      %p160 = scmp.ne.s32.totalorder %s152, %s155
      %p161 = scmp.eq.s32.totalorder %s16, 0
      %p162 = por %p160, %p161
      %p163 = scmp.ne.s32.totalorder %s152, %s155
      %p164 = scmp.eq.s32.totalorder %s21, 1
      %p165 = por %p163, %p164
      %p166 = scmp.ne.s32.totalorder %s155, %s156
      %p167 = scmp.eq.s32.totalorder %s21, 0
      %p168 = por %p166, %p167
      %p169 = scmp.ne.s32.totalorder %s155, %s156
      %p170 = scmp.eq.s32.totalorder %s22, 1
      %p171 = por %p169, %p170
      %p173 = scmp.ne.s32.totalorder %s156, %s172
      %p174 = scmp.eq.s32.totalorder %s22, 0
      %p175 = por %p173, %p174
      %s176 = ssub.s32 %s23, %s35
      %s177 = ssub.s32 %s24, %s31
      %s178 = sor.u32 %s176, %s177
      %p179 = scmp.eq.s32.totalorder %s178, 0
      %s181 = sadd.s32 %s180, 1
      %s182 = scalar_select %p179, %s180, %s181
      %p185 = pneg %p179
      %p186 = scmp.eq.s32.totalorder %s16, 1
      %p187 = por %p185, %p186
      %p188 = scmp.ne.s32.totalorder %s180, %s183
      %p189 = scmp.eq.s32.totalorder %s16, 0
      %p190 = por %p188, %p189
      %p191 = scmp.ne.s32.totalorder %s180, %s183
      %p192 = scmp.eq.s32.totalorder %s21, 1
      %p193 = por %p191, %p192
      %p194 = scmp.ne.s32.totalorder %s183, %s184
      %p195 = scmp.eq.s32.totalorder %s21, 0
      %p196 = por %p194, %p195
      %p197 = scmp.ne.s32.totalorder %s183, %s184
      %p198 = scmp.eq.s32.totalorder %s22, 1
      %p199 = por %p197, %p198
      %p201 = scmp.ne.s32.totalorder %s184, %s200
      %p202 = scmp.eq.s32.totalorder %s22, 0
      %p203 = por %p201, %p202
      %p204 = scmp.le.s32.totalorder 1, %s16
      %p205 = scmp.lt.s32.totalorder %s16, 3
      %p206 = pnand %p204, %p205
      %p207 = pneg %p206
      // Predicated region
      $region9: #{yolox_forward.5} parent=5 // pred_check
        _
      $region10: #{yolox_forward.5} parent=5 // pred_check_branch
        %209 = sbr.rel (%p206) target = $region12
      $region11: #{yolox_forward.5} parent=5 // pred_region
        %s210 = ssub.s32 %s16, 1
        // Predicated region
        $region13: #{yolox_forward.5} parent=11 // pred_check
          %p211 = pneg %p77
        $region14: #{yolox_forward.5} parent=11 // pred_check_branch
          %213 = sbr.rel (%p211) target = $region16
        $region15: #{yolox_forward.5} parent=11 // pred_region
          _
        $region16: #{yolox_forward.5} parent=11 // pred_fallthru
          _
        // Predicated region
        $region17: #{yolox_forward.5} parent=11 // pred_check
          %p214 = pneg %p98
        $region18: #{yolox_forward.5} parent=11 // pred_check_branch
          %216 = sbr.rel (%p214) target = $region20
        $region19: #{yolox_forward.5} parent=11 // pred_region
          _
        $region20: #{yolox_forward.5} parent=11 // pred_fallthru
          _
        // Predicated region
        $region21: #{yolox_forward.5} parent=11 // pred_check
          %p217 = pneg %p119
        $region22: #{yolox_forward.5} parent=11 // pred_check_branch
          %219 = sbr.rel (%p217) target = $region24
        $region23: #{yolox_forward.5} parent=11 // pred_region
          _
        $region24: #{yolox_forward.5} parent=11 // pred_fallthru
          _
        // Predicated region
        $region25: #{yolox_forward.5} parent=11 // pred_check
          %p220 = pneg %p140
        $region26: #{yolox_forward.5} parent=11 // pred_check_branch
          %222 = sbr.rel (%p220) target = $region28
        $region27: #{yolox_forward.5} parent=11 // pred_region
          _
        $region28: #{yolox_forward.5} parent=11 // pred_fallthru
          _
      $region12: #{yolox_forward.5} parent=5 // pred_fallthru
        _
      %p223 = scmp.lt.s32.totalorder %s16, 2
      // Predicated region
      $region29: #{yolox_forward.5} parent=5 // pred_check
        %p224 = pneg %p223
      $region30: #{yolox_forward.5} parent=5 // pred_check_branch
        %226 = sbr.rel (%p224) target = $region32
      $region31: #{yolox_forward.5} parent=5 // pred_region
        // Predicated region
        $region33: #{yolox_forward.5} parent=31 // pred_check
          %p227 = pneg %p50
        $region34: #{yolox_forward.5} parent=31 // pred_check_branch
          %229 = sbr.rel (%p227) target = $region36
        $region35: #{yolox_forward.5} parent=31 // pred_region
          %s230 = smul.u32 2, %s24
          %p231 = scmp.lt.s32.totalorder %s23, 1
          %s232 = scalar_select %p231, %s23, 1
          %p233 = scmp.lt.s32.totalorder %s230, 1
          %s234 = scalar_select %p233, %s230, 1
          %s235 = smul.addr %s234, 2
          %s236 = smul.addr %s232, 4
          %s237 = sadd.s32 %s235, %s236
          %s238 = smul.addr %s237, 4
          %s239 = scalar_lea.vmem %s0, %s238
          %s240 = smul.u32 2, %s24
        $region36: #{yolox_forward.5} parent=31 // pred_fallthru
          _
      $region32: #{yolox_forward.5} parent=5 // pred_fallthru
        _
      %p241 = scmp.le.s32.totalorder 1, %s16
      %p242 = scmp.lt.s32.totalorder %s16, 3
      %p243 = pnand %p241, %p242
      %p244 = pneg %p243
      // Predicated region
      $region37: #{yolox_forward.5} parent=5 // pred_check
        _
      $region38: #{yolox_forward.5} parent=5 // pred_check_branch
        %246 = sbr.rel (%p243) target = $region40
      $region39: #{yolox_forward.5} parent=5 // pred_region
        %s247 = ssub.s32 %s16, 1
        %s248 = smul.u32 2, %s26
        %p249 = scmp.lt.s32.totalorder %s25, 1
        %s250 = scalar_select %p249, %s25, 1
        %p251 = scmp.lt.s32.totalorder %s248, 1
        %s252 = scalar_select %p251, %s248, 1
        %s253 = smul.addr %s252, 2
        %s254 = smul.addr %s250, 4
        %s255 = sadd.s32 %s253, %s254
        %s256 = smul.addr %s255, 4
        %s257 = scalar_lea.vmem %s0, %s256
        %p258 = pneg %p56
        %p259 = pneg %p53
        %p260 = pneg %p77
        %p261 = pneg %p74
        %p262 = pneg %p98
        %p263 = pneg %p95
        %p264 = pneg %p119
        %p265 = pneg %p116
        %p266 = pneg %p140
        %p267 = pneg %p137
        %p268 = pneg %p168
        %p269 = pneg %p165
        %s270 = sand.u32 %s155, 1
        %s271 = scalar_lea.sflag [#allocation3], %s270
        %s272 = sand.u32 %s155, 1
        %s273 = smul.addr %s272, 8
        %s274 = scalar_lea.vmem [#allocation2], %s273
        %p275 = pneg %p196
        %p276 = pneg %p193
        %s277 = smul.u32 2, %s26
        %p278 = scmp.lt.s32.totalorder %s25, 1
        %s279 = scalar_select %p278, %s25, 1
        %p280 = scmp.lt.s32.totalorder %s277, 1
        %s281 = scalar_select %p280, %s277, 1
        %s282 = smul.addr %s279, 2
        %s283 = sadd.s32 %s281, %s282
        %s284 = smul.addr %s283, 8
        %s285 = scalar_lea.vmem %s6, %s284
        %s286 = smul.u32 2, %s26
        %p287 = scmp.lt.s32.totalorder %s25, 1
        %s288 = scalar_select %p287, %s25, 1
        %p289 = scmp.lt.s32.totalorder %s286, 1
        %s290 = scalar_select %p289, %s286, 1
        %s291 = smul.addr %s290, 2
        %s292 = smul.addr %s288, 4
        %s293 = sadd.s32 %s291, %s292
        %s294 = smul.addr %s293, 4
        %s295 = scalar_lea.vmem %s0, %s294
        %s296 = smul.u32 2, %s26
        %s297 = smul.u32 2, %s26
        %s298 = smul.u32 2, %s26
        %p299 = scmp.lt.s32.totalorder %s25, 1
        %s300 = scalar_select %p299, %s25, 1
        %p301 = scmp.lt.s32.totalorder %s298, 1
        %s302 = scalar_select %p301, %s298, 1
        %s303 = smul.addr %s300, 2
        %s304 = sadd.s32 %s302, %s303
        %s305 = smul.addr %s304, 8
        %s306 = scalar_lea.vmem %s6, %s305
        %s307 = smul.u32 2, %s26
        %v309 = vld [vmem:[%s295] sm:$0xff]
        %v310 = vld [vmem:[%s295 + $0x8] sm:$0xff]
        %v311 = vld [vmem:[%s1] sm:$0xf]
        %v312 = vld [vmem:[%s1 + $0x4] sm:$0xf]
        %v313 = vld [vmem:[%s1 + $0x8] sm:$0xf]
        %v314 = vld [vmem:[%s1 + $0xc] sm:$0xf]
        %v315 = vld [vmem:[%s1 + $0x10] sm:$0xf]
        %v316 = vld [vmem:[%s1 + $0x14] sm:$0xf]
        %v317 = vld [vmem:[%s1 + $0x18] sm:$0xf]
        %v318 = vld [vmem:[%s1 + $0x1c] sm:$0xf]
        %v319 = vld [vmem:[%s1 + $0x20] sm:$0xf]
        %v320 = vld [vmem:[%s1 + $0x24] sm:$0xf]
        %v321 = vld [vmem:[%s1 + $0x28] sm:$0xf]
        %v322 = vld [vmem:[%s1 + $0x2c] sm:$0xf]
        %v323 = vld [vmem:[%s1 + $0x30] sm:$0xf]
        %v324 = vld [vmem:[%s1 + $0x34] sm:$0xf]
        %v325 = vld [vmem:[%s1 + $0x38] sm:$0xf]
        %v326 = vld [vmem:[%s1 + $0x3c] sm:$0xf]
        %v327 = vld [vmem:[%s1 + $0x40] sm:$0xf]
        %v328 = vld [vmem:[%s1 + $0x44] sm:$0xf]
        %v329 = vld [vmem:[%s2] sm:$0x1]
        %v331 = vlaneseq
        %v332 = vshrl.u32 %v331, 7
        %v333 = vsub.s32 0, %v332
        %v334 = vrot.slane %v329, %v333
        %v338 = vunpack.c.l.b16 %v309
        %v339 = vunpack.c.h.b16 %v309
        %v340 = vunpack.c.l.b16 %v310
        %v341 = vunpack.c.h.b16 %v310
        %v342 = vpack.c.b16 %v340, %v338
        %v343 = vpack.c.b16 %v341, %v339
        %v363 = vunpack.c.l.b16 %v311
        %v364 = vunpack.c.l.b16 %v312
        %v365 = vunpack.c.l.b16 %v313
        %v366 = vunpack.c.l.b16 %v314
        %v367 = vunpack.c.l.b16 %v315
        %v368 = vunpack.c.l.b16 %v316
        %v369 = vunpack.c.l.b16 %v317
        %v370 = vunpack.c.l.b16 %v318
        %v371 = vunpack.c.l.b16 %v319
        %v372 = vunpack.c.l.b16 %v320
        %v373 = vunpack.c.l.b16 %v321
        %v374 = vunpack.c.l.b16 %v322
        %v375 = vunpack.c.l.b16 %v323
        %v376 = vunpack.c.l.b16 %v324
        %v377 = vunpack.c.l.b16 %v325
        %v378 = vunpack.c.l.b16 %v326
        %v379 = vunpack.c.l.b16 %v327
        %v380 = vunpack.c.l.b16 %v328
        %v381 = vpack.c.b16 %v364, %v363
        %v382 = vpack.c.b16 %v366, %v365
        %v383 = vpack.c.b16 %v368, %v367
        %v384 = vpack.c.b16 %v370, %v369
        %v385 = vpack.c.b16 %v372, %v371
        %v386 = vpack.c.b16 %v374, %v373
        %v387 = vpack.c.b16 %v376, %v375
        %v388 = vpack.c.b16 %v378, %v377
        %v389 = vpack.c.b16 %v380, %v379
        %vm399 = vcmask 130048
        %v401 = vsel %vm399, %v343, 0
        %403 = vmatprep.subr.bf16.mxu0 0
        %404 = vmatpush1.bf16.msra.mxu0 %v381
        %405 = vmatprep.subr.bf16.mxu0 0
        %406 = vmatpush1.bf16.msra.mxu0 %v382
        %407 = vmatprep.subr.bf16.mxu0 0
        %408 = vmatpush1.bf16.msra.mxu0 %v383
        %409 = vmatprep.subr.bf16.mxu0 0
        %410 = vmatpush1.bf16.msra.mxu0 %v384
        %411 = vmatprep.subr.bf16.mxu0 0
        %412 = vmatpush1.bf16.msra.mxu0 %v385
        %413 = vmatprep.subr.bf16.mxu0 0
        %414 = vmatpush1.bf16.msra.mxu0 %v386
        %415 = vmatprep.subr.bf16.mxu0 0
        %416 = vmatpush1.bf16.msra.mxu0 %v387
        %417 = vmatprep.subr.bf16.mxu0 0
        %418 = vmatpush1.bf16.msra.mxu0 %v388
        %419 = vmatprep.subr.bf16.mxu0 0
        %420 = vmatpush1.bf16.msra.mxu0 %v389
        %421 = vmatprep.subr.bf16.mxu0 0
        %422 = vmatpush1.bf16.msra.mxu0 0
        %423 = vmatprep.subr.bf16.mxu0 0
        %424 = vmatpush1.bf16.msra.mxu0 0
        %425 = vmatprep.subr.bf16.mxu0 0
        %426 = vmatpush1.bf16.msra.mxu0 0
        %427 = vmatprep.subr.bf16.mxu0 0
        %428 = vmatpush1.bf16.msra.mxu0 0
        %429 = vmatprep.subr.bf16.mxu0 0
        %430 = vmatpush1.bf16.msra.mxu0 0
        %431 = vmatprep.subr.bf16.mxu0 0
        %432 = vmatpush1.bf16.msra.mxu0 0
        %433 = vmatprep.subr.bf16.mxu0 0
        %434 = vmatpush1.bf16.msra.mxu0 0
        %435 = vmatprep.mubr.bf16.mxu0 %v401
        %436 = vmatmul.mubr.bf16.gmra.mrb[0].mxu0 %v342
        %v437 = vpop.f32.mrb[0].mxu0
        %v438 = vadd.f32 %v334, %v437
        %v439 = vpop.f32.mrb[0].mxu0
        %v440 = vpop.f32.mrb[0].mxu0
        %v441 = vadd.f32 %v334, %v440
        %v442 = vpop.f32.mrb[0].mxu0
        %443 = vdwg.mxu0
        %v444 = vxor.u32 %v438, 2147483648
        %v445 = vxor.u32 %v441, 2147483648
        %v446 = vmul.f32 %v444, 1.442695
        %v447 = vpow.pop %v446
        %v448 = vmul.f32 %v445, 1.442695
        %v449 = vpow.pop %v448
        %v450 = vadd.f32 %v447, 1.0
        %v451 = vadd.f32 %v449, 1.0
        %v452 = vrcp.pop %v450
        %v453 = vmul.f32 1.0, %v452
        %v454 = vrcp.pop %v451
        %v455 = vmul.f32 1.0, %v454
        %v456 = vmul.f32 %v438, %v453
        %v457 = vmul.f32 %v441, %v455
        %v458 = vpack.c.bf16 %v457, %v456
        %v460 = vunpack.c.l.b16 %v458
        %v461 = vunpack.c.h.b16 %v458
        %v462 = vpack.c.b16 %v460, %v460
        %v463 = vpack.c.b16 %v461, %v461
        %vm466 = vcmask 257024
        %467 = vst.msk [vmem:[%s274] sm:$0xf] %vm466, %v462
        %468 = vst.msk [vmem:[%s274 + $0x4] sm:$0xf] %vm466, %v463
        %v469 = vld [vmem:[%s3] sm:$0xf]
        %v470 = vld [vmem:[%s3 + $0x4] sm:$0xf]
        %v471 = vld [vmem:[%s3 + $0x8] sm:$0xf]
        %v472 = vld [vmem:[%s3 + $0xc] sm:$0xf]
        %v473 = vld [vmem:[%s4] sm:$0x1]
        %v475 = vlaneseq
        %v476 = vshrl.u32 %v475, 7
        %v477 = vsub.s32 0, %v476
        %v478 = vrot.slane %v473, %v477
        %v484 = vunpack.c.l.b16 %v469
        %v485 = vunpack.c.l.b16 %v470
        %v486 = vunpack.c.l.b16 %v471
        %v487 = vunpack.c.l.b16 %v472
        %v488 = vpack.c.b16 %v485, %v484
        %v489 = vpack.c.b16 %v487, %v486
        %vm492 = vcmask 261120
        %v494 = vsel %vm492, %v458, 0
        %496 = vmatprep.subr.bf16.mxu0 0
        %497 = vmatpush1.bf16.msra.mxu0 %v488
        %498 = vmatprep.subr.bf16.mxu0 0
        %499 = vmatpush1.bf16.msra.mxu0 %v489
        %500 = vmatprep.subr.bf16.mxu0 0
        %501 = vmatpush1.bf16.msra.mxu0 0
        %502 = vmatprep.subr.bf16.mxu0 0
        %503 = vmatpush1.bf16.msra.mxu0 0
        %504 = vmatprep.subr.bf16.mxu0 0
        %505 = vmatpush1.bf16.msra.mxu0 0
        %506 = vmatprep.subr.bf16.mxu0 0
        %507 = vmatpush1.bf16.msra.mxu0 0
        %508 = vmatprep.subr.bf16.mxu0 0
        %509 = vmatpush1.bf16.msra.mxu0 0
        %510 = vmatprep.subr.bf16.mxu0 0
        %511 = vmatpush1.bf16.msra.mxu0 0
        %512 = vmatprep.subr.bf16.mxu0 0
        %513 = vmatpush1.bf16.msra.mxu0 0
        %514 = vmatprep.subr.bf16.mxu0 0
        %515 = vmatpush1.bf16.msra.mxu0 0
        %516 = vmatprep.subr.bf16.mxu0 0
        %517 = vmatpush1.bf16.msra.mxu0 0
        %518 = vmatprep.subr.bf16.mxu0 0
        %519 = vmatpush1.bf16.msra.mxu0 0
        %520 = vmatprep.subr.bf16.mxu0 0
        %521 = vmatpush1.bf16.msra.mxu0 0
        %522 = vmatprep.subr.bf16.mxu0 0
        %523 = vmatpush1.bf16.msra.mxu0 0
        %524 = vmatprep.subr.bf16.mxu0 0
        %525 = vmatpush1.bf16.msra.mxu0 0
        %526 = vmatprep.subr.bf16.mxu0 0
        %527 = vmatpush1.bf16.msra.mxu0 0
        %528 = vmatprep.mubr.bf16.mxu0 0
        %529 = vmatmul.mubr.bf16.gmra.mrb[0].mxu0 %v494
        %v530 = vpop.f32.mrb[0].mxu0
        %v531 = vadd.f32 %v478, %v530
        %v532 = vpop.f32.mrb[0].mxu0
        %v533 = vpop.f32.mrb[0].mxu0
        %v534 = vadd.f32 %v478, %v533
        %v535 = vpop.f32.mrb[0].mxu0
        %536 = vdwg.mxu0
        %vm537 = vcmask 64512
        %538 = vst.msk [vmem:[%s306] sm:$0xff] %vm537, %v531
        %539 = vst.msk [vmem:[%s306 + $0x8] sm:$0xff] %vm537, %v534
        %s540 = sand.u32 %s155, 1
        %s541 = scalar_lea.sflag [#allocation3], %s540
        %s542 = sand.u32 %s155, 1
        %s543 = smul.addr %s542, 8
        %s544 = scalar_lea.vmem [#allocation2], %s543
        %s545 = smul.u32 2, %s26
        %p546 = scmp.lt.s32.totalorder %s25, 1
        %s547 = scalar_select %p546, %s25, 1
        %p548 = scmp.lt.s32.totalorder %s545, 1
        %s549 = scalar_select %p548, %s545, 1
        %s550 = smul.addr %s547, 2
        %s551 = sadd.s32 %s549, %s550
        %s552 = smul.addr %s551, 8
        %s553 = scalar_lea.vmem %s6, %s552
        // Predicated region
        $region41: #{yolox_forward.5} parent=39 // pred_check
          %p554 = pneg %p165
        $region42: #{yolox_forward.5} parent=39 // pred_check_branch
          %556 = sbr.rel (%p554) target = $region44
        $region43: #{yolox_forward.5} parent=39 // pred_region
          %s557 = smul.u32 2, %s26
          %s559 = ssub.s32 128, 128
          %560 = vsyncadd %s541, %s559
          %s561 = smul.addr %s25, 2
          %s562 = sadd.s32 %s557, %s561
          %s563 = smul.addr %s562, 64
          %s564 = scalar_lea.hbm %s5, %s563
          %s565 = sshll.u32 %s544, 4
          %s566 = int_to_ptr.vmem [resolvable:$true] %s565
          %571 = dma.vmem_to_hbm [thread:$0]  %s566, 128, %s564, %s541, 64, 64, 4
        $region44: #{yolox_forward.5} parent=39 // pred_fallthru
          _
        // Predicated region
        $region45: #{yolox_forward.5} parent=39 // pred_check
          %p572 = pneg %p193
        $region46: #{yolox_forward.5} parent=39 // pred_check_branch
          %574 = sbr.rel (%p572) target = $region48
        $region47: #{yolox_forward.5} parent=39 // pred_region
          %s575 = smul.u32 2, %s26
        $region48: #{yolox_forward.5} parent=39 // pred_fallthru
          _
      $region40: #{yolox_forward.5} parent=5 // pred_fallthru
        _
      %p576 = scmp.le.s32.totalorder 2, %s16
      // Predicated region
      $region49: #{yolox_forward.5} parent=5 // pred_check
        %p577 = pneg %p576
      $region50: #{yolox_forward.5} parent=5 // pred_check_branch
        %579 = sbr.rel (%p577) target = $region52
      $region51: #{yolox_forward.5} parent=5 // pred_region
        %s580 = ssub.s32 %s16, 2
        // Predicated region
        $region53: #{yolox_forward.5} parent=51 // pred_check
          %p581 = pneg %p171
        $region54: #{yolox_forward.5} parent=51 // pred_check_branch
          %583 = sbr.rel (%p581) target = $region56
        $region55: #{yolox_forward.5} parent=51 // pred_region
          %s584 = sand.u32 %s156, 1
          %s585 = scalar_lea.sflag [#allocation3], %s584
          %s586 = sand.u32 %s156, 1
          %s587 = smul.addr %s586, 8
          %s588 = scalar_lea.vmem [#allocation2], %s587
          %589 = dma.done %s585, 128
        $region56: #{yolox_forward.5} parent=51 // pred_fallthru
          _
        // Predicated region
        $region57: #{yolox_forward.5} parent=51 // pred_check
          %p590 = pneg %p199
        $region58: #{yolox_forward.5} parent=51 // pred_check_branch
          %592 = sbr.rel (%p590) target = $region60
        $region59: #{yolox_forward.5} parent=51 // pred_region
          %s593 = smul.u32 2, %s28
          %p594 = scmp.lt.s32.totalorder %s27, 1
          %s595 = scalar_select %p594, %s27, 1
          %p596 = scmp.lt.s32.totalorder %s593, 1
          %s597 = scalar_select %p596, %s593, 1
          %s598 = smul.addr %s595, 2
          %s599 = sadd.s32 %s597, %s598
          %s600 = smul.addr %s599, 8
          %s601 = scalar_lea.vmem %s6, %s600
        $region60: #{yolox_forward.5} parent=51 // pred_fallthru
          _
      $region52: #{yolox_forward.5} parent=5 // pred_fallthru
        _
    $region6: #{yolox_forward.5} parent=1 // loop_footer
      %s20 = sadd.s32 1, %s16
    $region7: #{yolox_forward.5} parent=1 // loop_footer_branch
      %15 = sbr.rel target = $region3
    $region8: #{yolox_forward.5} parent=1 // loop_exit
      _
    %602 = vsyncpa [#allocation3], 1
    %s603 = scalar_lea.sflag [#allocation3], 1
    %604 = vsyncpa %s603, 1

</llo_original>
